<compile_context>
chip_gen: v5e
topology: v5e:2x2
jax: 0.10.0
libtpu: 0.0.40
codegen_flags: <defaults>
</compile_context>

<pallas_src>
import jax
import jax.numpy as jnp
from jax.experimental import pallas as pl
from jax.experimental.pallas import tpu as pltpu

_COMPUTE_DTYPE = jnp.bfloat16   # MXU operand dtype; accumulation/bias math is float32


# ----------------------------------------------------------------------------
# In-kernel helpers
# ----------------------------------------------------------------------------
def _take_2x2_tap(t, h_out, w_out, c, rp, cp):
    """Select tap (rp, cp) of every 2x2 window.

    t: (2*h_out * 2*w_out, c) f32, rows in raster (h, w) order of the fine grid.
    Returns (h_out*w_out, c), rows in raster order of the coarse grid.
    Only leading/sublane-dim reshapes + static indexing (lane dim untouched),
    performed on unpacked f32 so no packed-bf16 sublane shuffles are needed.
    """
    t = t.reshape(2 * h_out * w_out, 2, c)[:, cp, :]                       # w-parity
    t = t.reshape(h_out, 2 * w_out, c)[:, rp * w_out:(rp + 1) * w_out, :]  # h-parity
    return t.reshape(h_out * w_out, c)


def _head_cf(w_t_ref, t_f32, b_ref, out_dtype):
    """Channels-first head: (c_out, c_in) x (rows, c_in)^T -> (c_out, rows).

    Emits the transposed result directly from the MXU (A @ B^T form) so no
    XLU transpose of the large activation is needed; bias is (c_out, 1)."""
    res = jax.lax.dot_general(
        w_t_ref[...], t_f32.astype(_COMPUTE_DTYPE),
        dimension_numbers=(((1,), (1,)), ((), ())),
        preferred_element_type=jnp.float32)
    return (res + b_ref[...]).astype(out_dtype)


def _make_kernel(bh4, w4):
    """Build the fused kernel for a block of bh4 stride-4 rows (width w4)."""
    h8b, w8 = bh4 // 2, w4 // 2
    h16b, w16 = h8b // 2, w8 // 2
    taps = ((0, 0), (0, 1), (1, 0), (1, 1))

    def kernel(x_ref, w0_ref, b0_ref, w1_ref, b1_ref, w2_ref, b2_ref,
               ws0t_ref, bs0_ref, ws1t_ref, bs1_ref, wf2t_ref, bf2_ref,
               o0_ref, o1_ref, o2_ref):
        f32 = jnp.float32
        cdt = _COMPUTE_DTYPE
        c1 = w0_ref.shape[-1]
        c2 = w1_ref.shape[-1]

        # ---- trunk stage 0: 4x4/s4 patch conv == one K=16*cin matmul on the
        # wrapper-im2col'd rows (x block is a contiguous HBM slab).
        t0 = jnp.dot(x_ref[...], w0_ref[...], preferred_element_type=f32) + b0_ref[...]

        # stride-4 level -> folded (neck0 @ conv_s0), stored channels-first.
        o0_ref[...] = _head_cf(ws0t_ref, t0, bs0_ref, o0_ref.dtype)

        # ---- trunk stage 1: 2x2/s2 patch conv. Taps extracted from f32 t0,
        # lane-concatenated -> ONE K=4*c1 matmul.
        p1 = jnp.concatenate(
            [_take_2x2_tap(t0, h8b, w8, c1, rp, cp) for rp, cp in taps],
            axis=-1).astype(cdt)                                  # (r1, 4*c1)
        t1 = jnp.dot(p1, w1_ref[...], preferred_element_type=f32) + b1_ref[...]

        # stride-8 level -> folded (neck1 @ conv_s1), channels-first.
        o1_ref[...] = _head_cf(ws1t_ref, t1, bs1_ref, o1_ref.dtype)

        # ---- trunk stage 2: 2x2/s2 patch conv, same fused-tap scheme.
        p2 = jnp.concatenate(
            [_take_2x2_tap(t1, h16b, w16, c2, rp, cp) for rp, cp in taps],
            axis=-1).astype(cdt)                                  # (r2, 4*c2)
        t2 = jnp.dot(p2, w2_ref[...], preferred_element_type=f32) + b2_ref[...]

        # stride-16 level: neck2 (bias already contains no_mem_embed).
        o2_ref[...] = _head_cf(wf2t_ref, t2, bf2_ref, o2_ref.dtype)

    return kernel


# ----------------------------------------------------------------------------
# Tile picking / VMEM budgeting
# ----------------------------------------------------------------------------
def _round_up(v, m):
    return -(-v // m) * m


def _vmem_physical_bytes():
    try:
        return int(pltpu.get_tpu_info().vmem_capacity_bytes)
    except Exception:
        return 64 * 1024 * 1024      # conservative (v7x per-core VMEM)


def _tile_vmem_bytes(bh16, w16, w4, k0, c1, c2, c3, ds0, ds1, dm):
    """Per-grid-step VMEM estimate: double-buffered I/O blocks plus the Mosaic
    internal scratch backing the large SSA temporaries (t0 / taps / t1 / t2)."""
    lane = lambda n: _round_up(max(n, 1), 128)
    sub = lambda n: _round_up(max(n, 1), 8)
    br0 = 4 * bh16 * w4
    br1 = 2 * bh16 * (w4 // 2)
    br2 = bh16 * w16
    x_blk = sub(br0) * lane(k0) * 2 * 2                      # bf16, 2 pipeline buffers
    o_blk = (sub(ds0) * lane(br0) + sub(ds1) * lane(br1) + sub(dm) * lane(br2)) * 4 * 2
    t0 = sub(br0) * lane(c1) * 4
    t1 = sub(br1) * lane(4 * c1) * 4
    t2 = sub(br2) * lane(4 * c2) * 4
    temps = 4 * t0 + 3 * t1 + 3 * t2 + sub(br2) * lane(c3) * 4
    return x_blk + o_blk + temps


def _pick_block_rows16(h16, w16, w4, k0, chans, budget_bytes, keep_two_blocks):
    """Largest bh16 (divisor of h16) whose working set fits the VMEM budget and
    whose non-full output blocks are 128-lane multiples.  On small-VMEM / 2-TC
    chips the grid is kept at length >= 2 (when possible) so the 'parallel'
    axis shards across both TensorCores."""
    valid = [b for b in range(1, h16 + 1)
             if h16 % b == 0 and (b == h16 or (b * w16) % 128 == 0)]
    fitting = [b for b in valid
               if _tile_vmem_bytes(b, w16, w4, k0, *chans) <= budget_bytes]
    pool = fitting if fitting else valid[:1]
    if keep_two_blocks:
        halved = [b for b in pool if h16 // b >= 2]
        if halved:
            pool = halved
    return max(pool)


# ----------------------------------------------------------------------------
# Wrapper
# ----------------------------------------------------------------------------
def sam2_image_encoder_forward(x_nchw, fp):
    B, cin, H, W = x_nchw.shape
    assert B == 1, "SAM2 export path reshapes with batch 1"
    assert H % 16 == 0 and W % 16 == 0
    h4, w4 = H // 4, W // 4
    h8, w8 = H // 8, W // 8
    h16, w16 = H // 16, W // 16
    k0 = 16 * cin
    c1 = fp["w0"].shape[-1]
    c2 = fp["w1"].shape[-1]
    c3 = fp["w2"].shape[-1]
    ds0 = fp["ws0_t"].shape[0]
    ds1 = fp["ws1_t"].shape[0]
    dm = fp["wf2_t"].shape[0]

    # Wrapper-side stage-0 im2col (the only wrapper data movement): rows in
    # raster (h4, w4) order, columns ordered (kh, kw, cin).  A block of rows
    # is then one fully contiguous HBM slab -> dense DMA, no 24-byte strided
    # descriptors.  (Lane padding 48->128 only affects the VMEM copy; K is not
    # zero-padded in HBM so input traffic stays minimal.)
    x = jnp.transpose(x_nchw, (0, 2, 3, 1)).reshape(h4, 4, w4, 4, cin)
    x = jnp.transpose(x, (0, 2, 1, 3, 4)).reshape(h4 * w4, k0).astype(_COMPUTE_DTYPE)

    weights = (fp["w0"], fp["b0"], fp["w1"], fp["b1"], fp["w2"], fp["b2"],
               fp["ws0_t"], fp["bs0"], fp["ws1_t"], fp["bs1"], fp["wf2_t"], fp["bf2"])

    # VMEM budgeting: raise the scoped limit explicitly (v5e default is 16 MiB)
    # and size the tile against what is left after the (double-buffered) weights.
    phys = _vmem_physical_bytes()
    vmem_limit = min(int(phys * 0.75), 100 * 1024 * 1024)
    w_bytes = sum(_round_up(max(a.shape[0], 1), 8) * _round_up(a.shape[-1], 128)
                  * a.dtype.itemsize * 2 for a in weights)
    budget = int(max(vmem_limit - w_bytes, 1) * 0.9)
    two_tc_like = phys <= 80 * 1024 * 1024    # v7x-style small-VMEM / 2-TC chips
    bh16 = _pick_block_rows16(h16, w16, w4, k0, (c1, c2, c3, ds0, ds1, dm),
                              budget, two_tc_like)

    grid = (h16 // bh16,)
    bh4 = 4 * bh16
    br0 = bh4 * w4          # stride-4 rows per grid step
    br1 = 2 * bh16 * w8     # stride-8 rows per grid step
    br2 = bh16 * w16        # stride-16 rows per grid step

    def _const(a):
        nd = a.ndim
        return pl.BlockSpec(a.shape, lambda i, _n=nd: (0,) * _n)

    grid_spec = pltpu.PrefetchScalarGridSpec(
        num_scalar_prefetch=0,
        grid=grid,
        in_specs=[pl.BlockSpec((br0, k0), lambda i: (i, 0))]
                 + [_const(a) for a in weights],
        out_specs=(
            pl.BlockSpec((ds0, br0), lambda i: (0, i)),
            pl.BlockSpec((ds1, br1), lambda i: (0, i)),
            pl.BlockSpec((dm, br2), lambda i: (0, i)),
        ),
    )

    out0, out1, out2 = pl.pallas_call(
        _make_kernel(bh4, w4),
        out_shape=(
            jax.ShapeDtypeStruct((ds0, h4 * w4), jnp.float32),
            jax.ShapeDtypeStruct((ds1, h8 * w8), jnp.float32),
            jax.ShapeDtypeStruct((dm, h16 * w16), jnp.float32),
        ),
        grid_spec=grid_spec,
        compiler_params=pltpu.CompilerParams(
            dimension_semantics=("parallel",),
            vmem_limit_bytes=vmem_limit),
    )(x, *weights)

    # Channels-first, lane-dense kernel outputs are already NCHW-flat: reshape
    # is a free view, no transpose needed.
    return (out0.reshape(1, ds0, h4, w4),
            out1.reshape(1, ds1, h8, w8),
            out2.reshape(1, dm, h16, w16))


# ----------------------------------------------------------------------------
# Parameters: raw init (mirrors module structure) + algebraic folding
# ----------------------------------------------------------------------------
def init_params(key, in_ch=3, c1=16, c2=32, c3=64, d_model=32):
    ks = jax.random.split(key, 18)

    def w(k, shape, scale=0.05):
        return jax.random.normal(k, shape, jnp.float32) * scale

    return {
        # trunk stage weights in (kh, kw, cin, cout) layout.
        "trunk0_w": w(ks[0], (4, 4, in_ch, c1)),
        "trunk0_b": w(ks[9], (c1,), 0.01),
        "trunk1_w": w(ks[1], (2, 2, c1, c2)),
        "trunk1_b": w(ks[10], (c2,), 0.01),
        "trunk2_w": w(ks[2], (2, 2, c2, c3)),
        "trunk2_b": w(ks[11], (c3,), 0.01),
        # FPN neck lateral 1x1 convs to d_model.
        "neck0_w": w(ks[3], (c1, d_model)), "neck0_b": w(ks[12], (d_model,), 0.01),
        "neck1_w": w(ks[4], (c2, d_model)), "neck1_b": w(ks[13], (d_model,), 0.01),
        "neck2_w": w(ks[5], (c3, d_model)), "neck2_b": w(ks[14], (d_model,), 0.01),
        # sam_mask_decoder.conv_s0 / conv_s1: 1x1, D -> D//8 and D -> D//4.
        "conv_s0_w": w(ks[6], (d_model, d_model // 8)),
        "conv_s0_b": w(ks[15], (d_model // 8,), 0.01),
        "conv_s1_w": w(ks[7], (d_model, d_model // 4)),
        "conv_s1_b": w(ks[16], (d_model // 4,), 0.01),
        # no_mem_embed: torch shape (1, 1, d_model); stored flat here.
        "no_mem_embed": w(ks[8], (d_model,), 0.02),
    }


def fold_params(p, compute_dtype=_COMPUTE_DTYPE):
    """Algebraic folding (no semantic change):
       - trunk convs reshaped to im2col / fused-tap matmul layouts,
       - neck0 followed by conv_s0 (both 1x1) -> one matmul (transposed for
         channels-first heads); likewise neck1/conv_s1,
       - '+ no_mem_embed' on the last level folded into that level's bias.
    Weights become bf16 MXU operands; biases stay f32 (VPU / v5e-safe)."""
    kh, kw, cin, c1 = p["trunk0_w"].shape
    w0 = p["trunk0_w"].reshape(kh * kw * cin, c1)                  # (16*cin, c1)
    w1 = p["trunk1_w"].reshape(-1, p["trunk1_w"].shape[-1])        # (4*c1, c2)
    w2 = p["trunk2_w"].reshape(-1, p["trunk2_w"].shape[-1])        # (4*c2, c3)
    ws0_t = (p["neck0_w"] @ p["conv_s0_w"]).T                      # (d//8, c1)
    bs0 = (p["neck0_b"] @ p["conv_s0_w"] + p["conv_s0_b"]).reshape(-1, 1)
    ws1_t = (p["neck1_w"] @ p["conv_s1_w"]).T                      # (d//4, c2)
    bs1 = (p["neck1_b"] @ p["conv_s1_w"] + p["conv_s1_b"]).reshape(-1, 1)
    wf2_t = p["neck2_w"].T                                         # (d, c3)
    bf2 = (p["neck2_b"] + p["no_mem_embed"]).reshape(-1, 1)

    wcast = lambda a: a.astype(compute_dtype)
    f32 = lambda a: a.astype(jnp.float32)
    return {
        "w0": wcast(w0), "b0": f32(p["trunk0_b"].reshape(1, -1)),
        "w1": wcast(w1), "b1": f32(p["trunk1_b"].reshape(1, -1)),
        "w2": wcast(w2), "b2": f32(p["trunk2_b"].reshape(1, -1)),
        "ws0_t": wcast(ws0_t), "bs0": f32(bs0),
        "ws1_t": wcast(ws1_t), "bs1": f32(bs1),
        "wf2_t": wcast(wf2_t), "bf2": f32(bf2),
    }


# ----------------------------------------------------------------------------
# Pure-JAX reference (dense im2col, f32) for a numerical sanity check
# ----------------------------------------------------------------------------
def _patchify(x_nhwc, k):
    B, H, W, C = x_nhwc.shape
    x = x_nhwc.reshape(B, H // k, k, W // k, k, C)
    x = x.transpose(0, 1, 3, 2, 4, 5)
    return x.reshape(B * (H // k) * (W // k), k * k * C)


def reference_forward(x_nchw, fp):
    f32 = jnp.float32
    B, cin, H, W = x_nchw.shape
    h4, w4, h8, w8, h16, w16 = H // 4, W // 4, H // 8, W // 8, H // 16, W // 16
    c1 = fp["w0"].shape[1]
    c2 = fp["w1"].shape[1]
    x = jnp.transpose(x_nchw, (0, 2, 3, 1)).astype(f32)

    t0 = _patchify(x, 4) @ fp["w0"].astype(f32) + fp["b0"].astype(f32)
    t1 = _patchify(t0.reshape(1, h4, w4, c1), 2) @ fp["w1"].astype(f32) + fp["b1"].astype(f32)
    t2 = _patchify(t1.reshape(1, h8, w8, c2), 2) @ fp["w2"].astype(f32) + fp["b2"].astype(f32)
    s0 = t0 @ fp["ws0_t"].astype(f32).T + fp["bs0"].astype(f32).T
    s1 = t1 @ fp["ws1_t"].astype(f32).T + fp["bs1"].astype(f32).T
    f2 = t2 @ fp["wf2_t"].astype(f32).T + fp["bf2"].astype(f32).T

    to_nchw = lambda rows, h, w: rows.reshape(1, h, w, -1).transpose(0, 3, 1, 2)
    return to_nchw(s0, h4, w4), to_nchw(s1, h8, w8), to_nchw(f2, h16, w16)


if __name__ == "__main__":
    key = jax.random.PRNGKey(0)
    k_x, k_p = jax.random.split(key)

    d_model = 32
    x = jax.random.normal(k_x, (1, 3, 64, 64), jnp.float32)   # NCHW input
    params = init_params(k_p, in_ch=3, c1=16, c2=32, c3=64, d_model=d_model)
    fparams = fold_params(params)

    feats0, feats1, feats2 = sam2_image_encoder_forward(x, fparams)
    jax.block_until_ready((feats0, feats1, feats2))

    assert feats0.shape == (1, d_model // 8, 16, 16)
    assert feats1.shape == (1, d_model // 4, 8, 8)
    assert feats2.shape == (1, d_model, 4, 4)

    # Numerical sanity vs. dense f32 reference (scaled tolerance covers the
    # bf16 MXU operands; activations stay f32 on the tap path).
    r0, r1, r2 = reference_forward(x, fparams)
    for got, ref in ((feats0, r0), (feats1, r1), (feats2, r2)):
        scale = 1.0 + float(jnp.max(jnp.abs(ref)))
        err = float(jnp.max(jnp.abs(got - ref.astype(jnp.float32))))
        assert err < 2e-2 * scale, f"max abs error {err} (scale {scale})"

    print("KERNEL_OK")
</pallas_src>

<mosaic_0001>
module attributes {stable_mosaic.version = 11 : i64} {
  func.func @kernel(%arg0: i32, %arg1: memref<256x48xbf16, #tpu.memory_space<vmem>>, %arg2: memref<48x16xbf16, #tpu.memory_space<vmem>>, %arg3: memref<1x16xf32, #tpu.memory_space<vmem>>, %arg4: memref<64x32xbf16, #tpu.memory_space<vmem>>, %arg5: memref<1x32xf32, #tpu.memory_space<vmem>>, %arg6: memref<128x64xbf16, #tpu.memory_space<vmem>>, %arg7: memref<1x64xf32, #tpu.memory_space<vmem>>, %arg8: memref<4x16xbf16, #tpu.memory_space<vmem>>, %arg9: memref<4x1xf32, #tpu.memory_space<vmem>>, %arg10: memref<8x32xbf16, #tpu.memory_space<vmem>>, %arg11: memref<8x1xf32, #tpu.memory_space<vmem>>, %arg12: memref<32x64xbf16, #tpu.memory_space<vmem>>, %arg13: memref<32x1xf32, #tpu.memory_space<vmem>>, %arg14: memref<4x256xf32, #tpu.memory_space<vmem>>, %arg15: memref<8x64xf32, #tpu.memory_space<vmem>>, %arg16: memref<32x16xf32, #tpu.memory_space<vmem>>) attributes {dimension_semantics = [#tpu.dimension_semantics<parallel>], iteration_bounds = array<i64: 1>, scalar_prefetch = 0 : i64, scratch_operands = 0 : i64, tpu.core_type = #tpu.core_type<tc>, window_params = [{transform_indices = @transform_0, window_bounds = array<i64: 256, 48>}, {pipeline_mode = #tpu.pipeline_mode<synchronous>, transform_indices = @transform_1, window_bounds = array<i64: 48, 16>}, {pipeline_mode = #tpu.pipeline_mode<synchronous>, transform_indices = @transform_2, window_bounds = array<i64: 1, 16>}, {pipeline_mode = #tpu.pipeline_mode<synchronous>, transform_indices = @transform_3, window_bounds = array<i64: 64, 32>}, {pipeline_mode = #tpu.pipeline_mode<synchronous>, transform_indices = @transform_4, window_bounds = array<i64: 1, 32>}, {pipeline_mode = #tpu.pipeline_mode<synchronous>, transform_indices = @transform_5, window_bounds = array<i64: 128, 64>}, {pipeline_mode = #tpu.pipeline_mode<synchronous>, transform_indices = @transform_6, window_bounds = array<i64: 1, 64>}, {pipeline_mode = #tpu.pipeline_mode<synchronous>, transform_indices = @transform_7, window_bounds = array<i64: 4, 16>}, {pipeline_mode = #tpu.pipeline_mode<synchronous>, transform_indices = @transform_8, window_bounds = array<i64: 4, 1>}, {pipeline_mode = #tpu.pipeline_mode<synchronous>, transform_indices = @transform_9, window_bounds = array<i64: 8, 32>}, {pipeline_mode = #tpu.pipeline_mode<synchronous>, transform_indices = @transform_10, window_bounds = array<i64: 8, 1>}, {pipeline_mode = #tpu.pipeline_mode<synchronous>, transform_indices = @transform_11, window_bounds = array<i64: 32, 64>}, {pipeline_mode = #tpu.pipeline_mode<synchronous>, transform_indices = @transform_12, window_bounds = array<i64: 32, 1>}, {transform_indices = @transform_13, window_bounds = array<i64: 4, 256>}, {transform_indices = @transform_14, window_bounds = array<i64: 8, 64>}, {transform_indices = @transform_15, window_bounds = array<i64: 32, 16>}]} {
    %c0 = arith.constant 0 : index
    %c0_0 = arith.constant 0 : index
    %0 = vector.load %arg1[%c0, %c0_0] : memref<256x48xbf16, #tpu.memory_space<vmem>>, vector<256x48xbf16>
    %c0_1 = arith.constant 0 : index
    %c0_2 = arith.constant 0 : index
    %1 = vector.load %arg2[%c0_1, %c0_2] : memref<48x16xbf16, #tpu.memory_space<vmem>>, vector<48x16xbf16>
    %cst = arith.constant dense<0.000000e+00> : vector<256x16xf32>
    %2 = tpu.matmul %0, %1, %cst {dimension_numbers = #tpu.dot_dimension_numbers<[1], [0], [0], [1], [0, 0, 1, 1], [], []>} : vector<256x48xbf16>, vector<48x16xbf16>, vector<256x16xf32> -> vector<256x16xf32>
    %c0_3 = arith.constant 0 : index
    %c0_4 = arith.constant 0 : index
    %3 = vector.load %arg3[%c0_3, %c0_4] : memref<1x16xf32, #tpu.memory_space<vmem>>, vector<1x16xf32>
    %4 = vector.broadcast %3 : vector<1x16xf32> to vector<256x16xf32>
    %5 = arith.addf %2, %4 : vector<256x16xf32>
    %c0_5 = arith.constant 0 : index
    %c0_6 = arith.constant 0 : index
    %6 = vector.load %arg8[%c0_5, %c0_6] : memref<4x16xbf16, #tpu.memory_space<vmem>>, vector<4x16xbf16>
    %7 = arith.truncf %5 : vector<256x16xf32> to vector<256x16xbf16>
    %cst_7 = arith.constant dense<0.000000e+00> : vector<4x256xf32>
    %8 = tpu.matmul %6, %7, %cst_7 {dimension_numbers = #tpu.dot_dimension_numbers<[1], [1], [0], [0], [0, 0, 1, 0], [], []>} : vector<4x16xbf16>, vector<256x16xbf16>, vector<4x256xf32> -> vector<4x256xf32>
    %c0_8 = arith.constant 0 : index
    %c0_9 = arith.constant 0 : index
    %9 = vector.load %arg9[%c0_8, %c0_9] : memref<4x1xf32, #tpu.memory_space<vmem>>, vector<4x1xf32>
    %10 = vector.broadcast %9 : vector<4x1xf32> to vector<4x256xf32>
    %11 = arith.addf %8, %10 : vector<4x256xf32>
    %c0_10 = arith.constant 0 : index
    %c0_11 = arith.constant 0 : index
    %12 = vector.load %arg14[%c0_10, %c0_11] : memref<4x256xf32, #tpu.memory_space<vmem>>, vector<4x256xf32>
    tpu.vector_store %arg14[%c0_10, %c0_11], %11 {strides = array<i32>} : memref<4x256xf32, #tpu.memory_space<vmem>>, vector<4x256xf32>,
    %13 = vector.shape_cast %5 : vector<256x16xf32> to vector<128x2x16xf32>
    %14 = vector.extract_strided_slice %13 {offsets = [0, 0, 0], sizes = [128, 1, 16], strides = [1, 1, 1]} : vector<128x2x16xf32> to vector<128x1x16xf32>
    %15 = vector.shape_cast %14 : vector<128x1x16xf32> to vector<128x16xf32>
    %16 = vector.shape_cast %15 : vector<128x16xf32> to vector<8x16x16xf32>
    %17 = vector.extract_strided_slice %16 {offsets = [0, 0, 0], sizes = [8, 8, 16], strides = [1, 1, 1]} : vector<8x16x16xf32> to vector<8x8x16xf32>
    %18 = vector.shape_cast %17 : vector<8x8x16xf32> to vector<64x16xf32>
    %19 = vector.shape_cast %5 : vector<256x16xf32> to vector<128x2x16xf32>
    %20 = vector.extract_strided_slice %19 {offsets = [0, 1, 0], sizes = [128, 1, 16], strides = [1, 1, 1]} : vector<128x2x16xf32> to vector<128x1x16xf32>
    %21 = vector.shape_cast %20 : vector<128x1x16xf32> to vector<128x16xf32>
    %22 = vector.shape_cast %21 : vector<128x16xf32> to vector<8x16x16xf32>
    %23 = vector.extract_strided_slice %22 {offsets = [0, 0, 0], sizes = [8, 8, 16], strides = [1, 1, 1]} : vector<8x16x16xf32> to vector<8x8x16xf32>
    %24 = vector.shape_cast %23 : vector<8x8x16xf32> to vector<64x16xf32>
    %25 = vector.shape_cast %5 : vector<256x16xf32> to vector<128x2x16xf32>
    %26 = vector.extract_strided_slice %25 {offsets = [0, 0, 0], sizes = [128, 1, 16], strides = [1, 1, 1]} : vector<128x2x16xf32> to vector<128x1x16xf32>
    %27 = vector.shape_cast %26 : vector<128x1x16xf32> to vector<128x16xf32>
    %28 = vector.shape_cast %27 : vector<128x16xf32> to vector<8x16x16xf32>
    %29 = vector.extract_strided_slice %28 {offsets = [0, 8, 0], sizes = [8, 8, 16], strides = [1, 1, 1]} : vector<8x16x16xf32> to vector<8x8x16xf32>
    %30 = vector.shape_cast %29 : vector<8x8x16xf32> to vector<64x16xf32>
    %31 = vector.shape_cast %5 : vector<256x16xf32> to vector<128x2x16xf32>
    %32 = vector.extract_strided_slice %31 {offsets = [0, 1, 0], sizes = [128, 1, 16], strides = [1, 1, 1]} : vector<128x2x16xf32> to vector<128x1x16xf32>
    %33 = vector.shape_cast %32 : vector<128x1x16xf32> to vector<128x16xf32>
    %34 = vector.shape_cast %33 : vector<128x16xf32> to vector<8x16x16xf32>
    %35 = vector.extract_strided_slice %34 {offsets = [0, 8, 0], sizes = [8, 8, 16], strides = [1, 1, 1]} : vector<8x16x16xf32> to vector<8x8x16xf32>
    %36 = vector.shape_cast %35 : vector<8x8x16xf32> to vector<64x16xf32>
    %37 = tpu.concatenate %18, %24, %30, %36 in 1 : vector<64x16xf32>, vector<64x16xf32>, vector<64x16xf32>, vector<64x16xf32> -> vector<64x64xf32>
    %38 = arith.truncf %37 : vector<64x64xf32> to vector<64x64xbf16>
    %c0_12 = arith.constant 0 : index
    %c0_13 = arith.constant 0 : index
    %39 = vector.load %arg4[%c0_12, %c0_13] : memref<64x32xbf16, #tpu.memory_space<vmem>>, vector<64x32xbf16>
    %cst_14 = arith.constant dense<0.000000e+00> : vector<64x32xf32>
    %40 = tpu.matmul %38, %39, %cst_14 {dimension_numbers = #tpu.dot_dimension_numbers<[1], [0], [0], [1], [0, 0, 1, 1], [], []>} : vector<64x64xbf16>, vector<64x32xbf16>, vector<64x32xf32> -> vector<64x32xf32>
    %c0_15 = arith.constant 0 : index
    %c0_16 = arith.constant 0 : index
    %41 = vector.load %arg5[%c0_15, %c0_16] : memref<1x32xf32, #tpu.memory_space<vmem>>, vector<1x32xf32>
    %42 = vector.broadcast %41 : vector<1x32xf32> to vector<64x32xf32>
    %43 = arith.addf %40, %42 : vector<64x32xf32>
    %c0_17 = arith.constant 0 : index
    %c0_18 = arith.constant 0 : index
    %44 = vector.load %arg10[%c0_17, %c0_18] : memref<8x32xbf16, #tpu.memory_space<vmem>>, vector<8x32xbf16>
    %45 = arith.truncf %43 : vector<64x32xf32> to vector<64x32xbf16>
    %cst_19 = arith.constant dense<0.000000e+00> : vector<8x64xf32>
    %46 = tpu.matmul %44, %45, %cst_19 {dimension_numbers = #tpu.dot_dimension_numbers<[1], [1], [0], [0], [0, 0, 1, 0], [], []>} : vector<8x32xbf16>, vector<64x32xbf16>, vector<8x64xf32> -> vector<8x64xf32>
    %c0_20 = arith.constant 0 : index
    %c0_21 = arith.constant 0 : index
    %47 = vector.load %arg11[%c0_20, %c0_21] : memref<8x1xf32, #tpu.memory_space<vmem>>, vector<8x1xf32>
    %48 = vector.broadcast %47 : vector<8x1xf32> to vector<8x64xf32>
    %49 = arith.addf %46, %48 : vector<8x64xf32>
    %c0_22 = arith.constant 0 : index
    %c0_23 = arith.constant 0 : index
    %50 = vector.load %arg15[%c0_22, %c0_23] : memref<8x64xf32, #tpu.memory_space<vmem>>, vector<8x64xf32>
    tpu.vector_store %arg15[%c0_22, %c0_23], %49 {strides = array<i32>} : memref<8x64xf32, #tpu.memory_space<vmem>>, vector<8x64xf32>,
    %51 = vector.shape_cast %43 : vector<64x32xf32> to vector<32x2x32xf32>
    %52 = vector.extract_strided_slice %51 {offsets = [0, 0, 0], sizes = [32, 1, 32], strides = [1, 1, 1]} : vector<32x2x32xf32> to vector<32x1x32xf32>
    %53 = vector.shape_cast %52 : vector<32x1x32xf32> to vector<32x32xf32>
    %54 = vector.shape_cast %53 : vector<32x32xf32> to vector<4x8x32xf32>
    %55 = vector.extract_strided_slice %54 {offsets = [0, 0, 0], sizes = [4, 4, 32], strides = [1, 1, 1]} : vector<4x8x32xf32> to vector<4x4x32xf32>
    %56 = vector.shape_cast %55 : vector<4x4x32xf32> to vector<16x32xf32>
    %57 = vector.shape_cast %43 : vector<64x32xf32> to vector<32x2x32xf32>
    %58 = vector.extract_strided_slice %57 {offsets = [0, 1, 0], sizes = [32, 1, 32], strides = [1, 1, 1]} : vector<32x2x32xf32> to vector<32x1x32xf32>
    %59 = vector.shape_cast %58 : vector<32x1x32xf32> to vector<32x32xf32>
    %60 = vector.shape_cast %59 : vector<32x32xf32> to vector<4x8x32xf32>
    %61 = vector.extract_strided_slice %60 {offsets = [0, 0, 0], sizes = [4, 4, 32], strides = [1, 1, 1]} : vector<4x8x32xf32> to vector<4x4x32xf32>
    %62 = vector.shape_cast %61 : vector<4x4x32xf32> to vector<16x32xf32>
    %63 = vector.shape_cast %43 : vector<64x32xf32> to vector<32x2x32xf32>
    %64 = vector.extract_strided_slice %63 {offsets = [0, 0, 0], sizes = [32, 1, 32], strides = [1, 1, 1]} : vector<32x2x32xf32> to vector<32x1x32xf32>
    %65 = vector.shape_cast %64 : vector<32x1x32xf32> to vector<32x32xf32>
    %66 = vector.shape_cast %65 : vector<32x32xf32> to vector<4x8x32xf32>
    %67 = vector.extract_strided_slice %66 {offsets = [0, 4, 0], sizes = [4, 4, 32], strides = [1, 1, 1]} : vector<4x8x32xf32> to vector<4x4x32xf32>
    %68 = vector.shape_cast %67 : vector<4x4x32xf32> to vector<16x32xf32>
    %69 = vector.shape_cast %43 : vector<64x32xf32> to vector<32x2x32xf32>
    %70 = vector.extract_strided_slice %69 {offsets = [0, 1, 0], sizes = [32, 1, 32], strides = [1, 1, 1]} : vector<32x2x32xf32> to vector<32x1x32xf32>
    %71 = vector.shape_cast %70 : vector<32x1x32xf32> to vector<32x32xf32>
    %72 = vector.shape_cast %71 : vector<32x32xf32> to vector<4x8x32xf32>
    %73 = vector.extract_strided_slice %72 {offsets = [0, 4, 0], sizes = [4, 4, 32], strides = [1, 1, 1]} : vector<4x8x32xf32> to vector<4x4x32xf32>
    %74 = vector.shape_cast %73 : vector<4x4x32xf32> to vector<16x32xf32>
    %75 = tpu.concatenate %56, %62, %68, %74 in 1 : vector<16x32xf32>, vector<16x32xf32>, vector<16x32xf32>, vector<16x32xf32> -> vector<16x128xf32>
    %76 = arith.truncf %75 : vector<16x128xf32> to vector<16x128xbf16>
    %c0_24 = arith.constant 0 : index
    %c0_25 = arith.constant 0 : index
    %77 = vector.load %arg6[%c0_24, %c0_25] : memref<128x64xbf16, #tpu.memory_space<vmem>>, vector<128x64xbf16>
    %cst_26 = arith.constant dense<0.000000e+00> : vector<16x64xf32>
    %78 = tpu.matmul %76, %77, %cst_26 {dimension_numbers = #tpu.dot_dimension_numbers<[1], [0], [0], [1], [0, 0, 1, 1], [], []>} : vector<16x128xbf16>, vector<128x64xbf16>, vector<16x64xf32> -> vector<16x64xf32>
    %c0_27 = arith.constant 0 : index
    %c0_28 = arith.constant 0 : index
    %79 = vector.load %arg7[%c0_27, %c0_28] : memref<1x64xf32, #tpu.memory_space<vmem>>, vector<1x64xf32>
    %80 = vector.broadcast %79 : vector<1x64xf32> to vector<16x64xf32>
    %81 = arith.addf %78, %80 : vector<16x64xf32>
    %c0_29 = arith.constant 0 : index
    %c0_30 = arith.constant 0 : index
    %82 = vector.load %arg12[%c0_29, %c0_30] : memref<32x64xbf16, #tpu.memory_space<vmem>>, vector<32x64xbf16>
    %83 = arith.truncf %81 : vector<16x64xf32> to vector<16x64xbf16>
    %cst_31 = arith.constant dense<0.000000e+00> : vector<32x16xf32>
    %84 = tpu.matmul %82, %83, %cst_31 {dimension_numbers = #tpu.dot_dimension_numbers<[1], [1], [0], [0], [0, 0, 1, 0], [], []>} : vector<32x64xbf16>, vector<16x64xbf16>, vector<32x16xf32> -> vector<32x16xf32>
    %c0_32 = arith.constant 0 : index
    %c0_33 = arith.constant 0 : index
    %85 = vector.load %arg13[%c0_32, %c0_33] : memref<32x1xf32, #tpu.memory_space<vmem>>, vector<32x1xf32>
    %86 = vector.broadcast %85 : vector<32x1xf32> to vector<32x16xf32>
    %87 = arith.addf %84, %86 : vector<32x16xf32>
    %c0_34 = arith.constant 0 : index
    %c0_35 = arith.constant 0 : index
    %88 = vector.load %arg16[%c0_34, %c0_35] : memref<32x16xf32, #tpu.memory_space<vmem>>, vector<32x16xf32>
    tpu.vector_store %arg16[%c0_34, %c0_35], %87 {strides = array<i32>} : memref<32x16xf32, #tpu.memory_space<vmem>>, vector<32x16xf32>,
    return
  }
  func.func @transform_0(%arg0: i32) -> (i32, i32) {
    %c0_i32 = arith.constant 0 : i32
    %c0_i32_0 = arith.constant 0 : i32
    return %arg0, %c0_i32 : i32, i32
  }
  func.func @transform_1(%arg0: i32) -> (i32, i32) {
    %c0_i32 = arith.constant 0 : i32
    %c0_i32_0 = arith.constant 0 : i32
    %c0_i32_1 = arith.constant 0 : i32
    return %c0_i32, %c0_i32_0 : i32, i32
  }
  func.func @transform_2(%arg0: i32) -> (i32, i32) {
    %c0_i32 = arith.constant 0 : i32
    %c0_i32_0 = arith.constant 0 : i32
    %c0_i32_1 = arith.constant 0 : i32
    return %c0_i32, %c0_i32_0 : i32, i32
  }
  func.func @transform_3(%arg0: i32) -> (i32, i32) {
    %c0_i32 = arith.constant 0 : i32
    %c0_i32_0 = arith.constant 0 : i32
    %c0_i32_1 = arith.constant 0 : i32
    return %c0_i32, %c0_i32_0 : i32, i32
  }
  func.func @transform_4(%arg0: i32) -> (i32, i32) {
    %c0_i32 = arith.constant 0 : i32
    %c0_i32_0 = arith.constant 0 : i32
    %c0_i32_1 = arith.constant 0 : i32
    return %c0_i32, %c0_i32_0 : i32, i32
  }
  func.func @transform_5(%arg0: i32) -> (i32, i32) {
    %c0_i32 = arith.constant 0 : i32
    %c0_i32_0 = arith.constant 0 : i32
    %c0_i32_1 = arith.constant 0 : i32
    return %c0_i32, %c0_i32_0 : i32, i32
  }
  func.func @transform_6(%arg0: i32) -> (i32, i32) {
    %c0_i32 = arith.constant 0 : i32
    %c0_i32_0 = arith.constant 0 : i32
    %c0_i32_1 = arith.constant 0 : i32
    return %c0_i32, %c0_i32_0 : i32, i32
  }
  func.func @transform_7(%arg0: i32) -> (i32, i32) {
    %c0_i32 = arith.constant 0 : i32
    %c0_i32_0 = arith.constant 0 : i32
    %c0_i32_1 = arith.constant 0 : i32
    return %c0_i32, %c0_i32_0 : i32, i32
  }
  func.func @transform_8(%arg0: i32) -> (i32, i32) {
    %c0_i32 = arith.constant 0 : i32
    %c0_i32_0 = arith.constant 0 : i32
    %c0_i32_1 = arith.constant 0 : i32
    return %c0_i32, %c0_i32_0 : i32, i32
  }
  func.func @transform_9(%arg0: i32) -> (i32, i32) {
    %c0_i32 = arith.constant 0 : i32
    %c0_i32_0 = arith.constant 0 : i32
    %c0_i32_1 = arith.constant 0 : i32
    return %c0_i32, %c0_i32_0 : i32, i32
  }
  func.func @transform_10(%arg0: i32) -> (i32, i32) {
    %c0_i32 = arith.constant 0 : i32
    %c0_i32_0 = arith.constant 0 : i32
    %c0_i32_1 = arith.constant 0 : i32
    return %c0_i32, %c0_i32_0 : i32, i32
  }
  func.func @transform_11(%arg0: i32) -> (i32, i32) {
    %c0_i32 = arith.constant 0 : i32
    %c0_i32_0 = arith.constant 0 : i32
    %c0_i32_1 = arith.constant 0 : i32
    return %c0_i32, %c0_i32_0 : i32, i32
  }
  func.func @transform_12(%arg0: i32) -> (i32, i32) {
    %c0_i32 = arith.constant 0 : i32
    %c0_i32_0 = arith.constant 0 : i32
    %c0_i32_1 = arith.constant 0 : i32
    return %c0_i32, %c0_i32_0 : i32, i32
  }
  func.func @transform_13(%arg0: i32) -> (i32, i32) {
    %c0_i32 = arith.constant 0 : i32
    %c0_i32_0 = arith.constant 0 : i32
    return %c0_i32, %arg0 : i32, i32
  }
  func.func @transform_14(%arg0: i32) -> (i32, i32) {
    %c0_i32 = arith.constant 0 : i32
    %c0_i32_0 = arith.constant 0 : i32
    return %c0_i32, %arg0 : i32, i32
  }
  func.func @transform_15(%arg0: i32) -> (i32, i32) {
    %c0_i32 = arith.constant 0 : i32
    %c0_i32_0 = arith.constant 0 : i32
    return %c0_i32, %arg0 : i32, i32
  }
}

</mosaic_0001>

<llo_original>
// kernel: tpu_custom_call.1
$region0: #{tpu_custom_call.1}
  #allocation0 [shape = 'u32[]', space=smem, size = 0x4, offset = 0x4, fixed_abs, tag = 'smem constant byte address 0x4 - core index']
  #allocation1 [shape = 'u32[72,128]{1,0:T(1,128)}', space=vmem, size = 0x9000, scoped, tag = 'internal scratch']
  %s0 = inlined_call_operand.vmem [shape: bf16[256,48], index: 0, kind: input, shape index: {}]
  %s1 = inlined_call_operand.vmem [shape: bf16[48,16], index: 1, kind: input, shape index: {}]
  %s2 = inlined_call_operand.vmem [shape: f32[1,16], index: 2, kind: input, shape index: {}]
  %s3 = inlined_call_operand.vmem [shape: bf16[64,32], index: 3, kind: input, shape index: {}]
  %s4 = inlined_call_operand.vmem [shape: f32[1,32], index: 4, kind: input, shape index: {}]
  %s5 = inlined_call_operand.vmem [shape: bf16[128,64], index: 5, kind: input, shape index: {}]
  %s6 = inlined_call_operand.vmem [shape: f32[1,64], index: 6, kind: input, shape index: {}]
  %s7 = inlined_call_operand.vmem [shape: bf16[4,16], index: 7, kind: input, shape index: {}]
  %s8 = inlined_call_operand.vmem [shape: f32[4,1], index: 8, kind: input, shape index: {}]
  %s9 = inlined_call_operand.vmem [shape: bf16[8,32], index: 9, kind: input, shape index: {}]
  %s10 = inlined_call_operand.vmem [shape: f32[8,1], index: 10, kind: input, shape index: {}]
  %s11 = inlined_call_operand.vmem [shape: bf16[32,64], index: 11, kind: input, shape index: {}]
  %s12 = inlined_call_operand.vmem [shape: f32[32,1], index: 12, kind: input, shape index: {}]
  %s13 = inlined_call_operand.hbm [shape: f32[4,256], index: 13, kind: output, shape index: {0}]
  %s14 = inlined_call_operand.hbm [shape: f32[8,64], index: 14, kind: output, shape index: {1}]
  %s15 = inlined_call_operand.vmem [shape: f32[32,16], index: 15, kind: output, shape index: {2}]
  %16 = xla_tuple %s13, %s14, %s15
  %s17 = sld [smem:[#allocation0]]
  $region78: #{tpu_custom_call.1} parent=0
    _
  %s19 = ssub.s32 1, %s17
  %s20 = scalar_select 0, %s19, %s17
  $region1: #{tpu_custom_call.1} parent=0
    #allocation2 [shape = 'u8[4096]{0}', space=vmem, size = 0x1000, scoped, tag = 'output window, operand 0, single buffered']
    #allocation3 [shape = 's32[1]{0}', space=sflag, size = 0x4, scoped, tag = 'scoped memory for tpu_custom_call.1']
    #allocation4 [shape = 'u8[4096]{0}', space=vmem, size = 0x1000, scoped, tag = 'output window, operand 1, single buffered']
    #allocation5 [shape = 's32[1]{0}', space=sflag, size = 0x4, scoped, tag = 'scoped memory for tpu_custom_call.1']
    %21 = vsyncpa [#allocation3], 0
    %22 = vsyncpa [#allocation5], 0
    // Predicated region
    $region2: #{tpu_custom_call.1} parent=1 // pred_check
      _
    $region3: #{tpu_custom_call.1} parent=1 // pred_check_branch
      %24 = sbr.rel (0) target = $region5
    $region4: #{tpu_custom_call.1} parent=1 // pred_region
      _
    $region5: #{tpu_custom_call.1} parent=1 // pred_fallthru
      _
    // Predicated region
    $region6: #{tpu_custom_call.1} parent=1 // pred_check
      _
    $region7: #{tpu_custom_call.1} parent=1 // pred_check_branch
      %26 = sbr.rel (0) target = $region9
    $region8: #{tpu_custom_call.1} parent=1 // pred_region
      _
    $region9: #{tpu_custom_call.1} parent=1 // pred_fallthru
      _
    // Predicated region
    $region10: #{tpu_custom_call.1} parent=1 // pred_check
      _
    $region11: #{tpu_custom_call.1} parent=1 // pred_check_branch
      %28 = sbr.rel (0) target = $region13
    $region12: #{tpu_custom_call.1} parent=1 // pred_region
      _
    $region13: #{tpu_custom_call.1} parent=1 // pred_fallthru
      _
    // Predicated region
    $region14: #{tpu_custom_call.1} parent=1 // pred_check
      _
    $region15: #{tpu_custom_call.1} parent=1 // pred_check_branch
      %30 = sbr.rel (0) target = $region17
    $region16: #{tpu_custom_call.1} parent=1 // pred_region
      _
    $region17: #{tpu_custom_call.1} parent=1 // pred_fallthru
      _
    // Predicated region
    $region18: #{tpu_custom_call.1} parent=1 // pred_check
      _
    $region19: #{tpu_custom_call.1} parent=1 // pred_check_branch
      %32 = sbr.rel (0) target = $region21
    $region20: #{tpu_custom_call.1} parent=1 // pred_region
      _
    $region21: #{tpu_custom_call.1} parent=1 // pred_fallthru
      _
    // Predicated region
    $region22: #{tpu_custom_call.1} parent=1 // pred_check
      _
    $region23: #{tpu_custom_call.1} parent=1 // pred_check_branch
      %34 = sbr.rel (0) target = $region25
    $region24: #{tpu_custom_call.1} parent=1 // pred_region
      _
    $region25: #{tpu_custom_call.1} parent=1 // pred_fallthru
      _
    // Predicated region
    $region26: #{tpu_custom_call.1} parent=1 // pred_check
      _
    $region27: #{tpu_custom_call.1} parent=1 // pred_check_branch
      %36 = sbr.rel (0) target = $region29
    $region28: #{tpu_custom_call.1} parent=1 // pred_region
      _
    $region29: #{tpu_custom_call.1} parent=1 // pred_fallthru
      _
    // Predicated region
    $region30: #{tpu_custom_call.1} parent=1 // pred_check
      _
    $region31: #{tpu_custom_call.1} parent=1 // pred_check_branch
      %38 = sbr.rel (0) target = $region33
    $region32: #{tpu_custom_call.1} parent=1 // pred_region
      _
    $region33: #{tpu_custom_call.1} parent=1 // pred_fallthru
      _
    // Predicated region
    $region34: #{tpu_custom_call.1} parent=1 // pred_check
      _
    $region35: #{tpu_custom_call.1} parent=1 // pred_check_branch
      %40 = sbr.rel (0) target = $region37
    $region36: #{tpu_custom_call.1} parent=1 // pred_region
      _
    $region37: #{tpu_custom_call.1} parent=1 // pred_fallthru
      _
    // Predicated region
    $region38: #{tpu_custom_call.1} parent=1 // pred_check
      _
    $region39: #{tpu_custom_call.1} parent=1 // pred_check_branch
      %42 = sbr.rel (0) target = $region41
    $region40: #{tpu_custom_call.1} parent=1 // pred_region
      _
    $region41: #{tpu_custom_call.1} parent=1 // pred_fallthru
      _
    // Predicated region
    $region42: #{tpu_custom_call.1} parent=1 // pred_check
      _
    $region43: #{tpu_custom_call.1} parent=1 // pred_check_branch
      %44 = sbr.rel (0) target = $region45
    $region44: #{tpu_custom_call.1} parent=1 // pred_region
      _
    $region45: #{tpu_custom_call.1} parent=1 // pred_fallthru
      _
    // Predicated region
    $region46: #{tpu_custom_call.1} parent=1 // pred_check
      _
    $region47: #{tpu_custom_call.1} parent=1 // pred_check_branch
      %46 = sbr.rel (0) target = $region49
    $region48: #{tpu_custom_call.1} parent=1 // pred_region
      _
    $region49: #{tpu_custom_call.1} parent=1 // pred_fallthru
      _
    // Predicated region
    $region50: #{tpu_custom_call.1} parent=1 // pred_check
      _
    $region51: #{tpu_custom_call.1} parent=1 // pred_check_branch
      %48 = sbr.rel (0) target = $region53
    $region52: #{tpu_custom_call.1} parent=1 // pred_region
      _
    $region53: #{tpu_custom_call.1} parent=1 // pred_fallthru
      _
    %v50 = vld [vmem:[%s0] sm:$0xf]
    %v51 = vld [vmem:[%s0 + $0x4] sm:$0xf]
    %v52 = vld [vmem:[%s0 + $0x8] sm:$0xf]
    %v53 = vld [vmem:[%s0 + $0xc] sm:$0xf]
    %v54 = vld [vmem:[%s0 + $0x10] sm:$0xf]
    %v55 = vld [vmem:[%s0 + $0x14] sm:$0xf]
    %v56 = vld [vmem:[%s0 + $0x18] sm:$0xf]
    %v57 = vld [vmem:[%s0 + $0x1c] sm:$0xf]
    %v58 = vld [vmem:[%s0 + $0x20] sm:$0xf]
    %v59 = vld [vmem:[%s0 + $0x24] sm:$0xf]
    %v60 = vld [vmem:[%s0 + $0x28] sm:$0xf]
    %v61 = vld [vmem:[%s0 + $0x2c] sm:$0xf]
    %v62 = vld [vmem:[%s0 + $0x30] sm:$0xf]
    %v63 = vld [vmem:[%s0 + $0x34] sm:$0xf]
    %v64 = vld [vmem:[%s0 + $0x38] sm:$0xf]
    %v65 = vld [vmem:[%s0 + $0x3c] sm:$0xf]
    %v66 = vld [vmem:[%s0 + $0x40] sm:$0xf]
    %v67 = vld [vmem:[%s0 + $0x44] sm:$0xf]
    %v68 = vld [vmem:[%s0 + $0x48] sm:$0xf]
    %v69 = vld [vmem:[%s0 + $0x4c] sm:$0xf]
    %v70 = vld [vmem:[%s0 + $0x50] sm:$0xf]
    %v71 = vld [vmem:[%s0 + $0x54] sm:$0xf]
    %v72 = vld [vmem:[%s0 + $0x58] sm:$0xf]
    %v73 = vld [vmem:[%s0 + $0x5c] sm:$0xf]
    %v74 = vld [vmem:[%s0 + $0x60] sm:$0xf]
    %v75 = vld [vmem:[%s0 + $0x64] sm:$0xf]
    %v76 = vld [vmem:[%s0 + $0x68] sm:$0xf]
    %v77 = vld [vmem:[%s0 + $0x6c] sm:$0xf]
    %v78 = vld [vmem:[%s0 + $0x70] sm:$0xf]
    %v79 = vld [vmem:[%s0 + $0x74] sm:$0xf]
    %v80 = vld [vmem:[%s0 + $0x78] sm:$0xf]
    %v81 = vld [vmem:[%s0 + $0x7c] sm:$0xf]
    %v82 = vld [vmem:[%s1] sm:$0xf]
    %v83 = vld [vmem:[%s1 + $0x4] sm:$0xf]
    %v84 = vld [vmem:[%s1 + $0x8] sm:$0xf]
    %v85 = vld [vmem:[%s1 + $0xc] sm:$0xf]
    %v86 = vld [vmem:[%s1 + $0x10] sm:$0xf]
    %v87 = vld [vmem:[%s1 + $0x14] sm:$0xf]
    %v88 = vld [vmem:[%s2] sm:$0x1]
    %v90 = vperm.slane %v88, 0
    %v124 = vunpack.c.l.b16 %v50
    %v125 = vunpack.c.l.b16 %v51
    %v126 = vunpack.c.l.b16 %v52
    %v127 = vunpack.c.l.b16 %v53
    %v128 = vunpack.c.l.b16 %v54
    %v129 = vunpack.c.l.b16 %v55
    %v130 = vunpack.c.l.b16 %v56
    %v131 = vunpack.c.l.b16 %v57
    %v132 = vunpack.c.l.b16 %v58
    %v133 = vunpack.c.l.b16 %v59
    %v134 = vunpack.c.l.b16 %v60
    %v135 = vunpack.c.l.b16 %v61
    %v136 = vunpack.c.l.b16 %v62
    %v137 = vunpack.c.l.b16 %v63
    %v138 = vunpack.c.l.b16 %v64
    %v139 = vunpack.c.l.b16 %v65
    %v140 = vunpack.c.l.b16 %v66
    %v141 = vunpack.c.l.b16 %v67
    %v142 = vunpack.c.l.b16 %v68
    %v143 = vunpack.c.l.b16 %v69
    %v144 = vunpack.c.l.b16 %v70
    %v145 = vunpack.c.l.b16 %v71
    %v146 = vunpack.c.l.b16 %v72
    %v147 = vunpack.c.l.b16 %v73
    %v148 = vunpack.c.l.b16 %v74
    %v149 = vunpack.c.l.b16 %v75
    %v150 = vunpack.c.l.b16 %v76
    %v151 = vunpack.c.l.b16 %v77
    %v152 = vunpack.c.l.b16 %v78
    %v153 = vunpack.c.l.b16 %v79
    %v154 = vunpack.c.l.b16 %v80
    %v155 = vunpack.c.l.b16 %v81
    %v156 = vpack.c.b16 %v125, %v124
    %v157 = vpack.c.b16 %v127, %v126
    %v158 = vpack.c.b16 %v129, %v128
    %v159 = vpack.c.b16 %v131, %v130
    %v160 = vpack.c.b16 %v133, %v132
    %v161 = vpack.c.b16 %v135, %v134
    %v162 = vpack.c.b16 %v137, %v136
    %v163 = vpack.c.b16 %v139, %v138
    %v164 = vpack.c.b16 %v141, %v140
    %v165 = vpack.c.b16 %v143, %v142
    %v166 = vpack.c.b16 %v145, %v144
    %v167 = vpack.c.b16 %v147, %v146
    %v168 = vpack.c.b16 %v149, %v148
    %v169 = vpack.c.b16 %v151, %v150
    %v170 = vpack.c.b16 %v153, %v152
    %v171 = vpack.c.b16 %v155, %v154
    %v178 = vunpack.c.l.b16 %v82
    %v179 = vunpack.c.l.b16 %v83
    %v180 = vunpack.c.l.b16 %v84
    %v181 = vunpack.c.l.b16 %v85
    %v182 = vunpack.c.l.b16 %v86
    %v183 = vunpack.c.l.b16 %v87
    %v184 = vpack.c.b16 %v179, %v178
    %v185 = vpack.c.b16 %v181, %v180
    %v186 = vpack.c.b16 %v183, %v182
    %vm190 = vcmask 392192
    %v192 = vsel %vm190, %v156, 0
    %v195 = vsel %vm190, %v157, 0
    %v198 = vsel %vm190, %v158, 0
    %v201 = vsel %vm190, %v159, 0
    %v204 = vsel %vm190, %v160, 0
    %v207 = vsel %vm190, %v161, 0
    %v210 = vsel %vm190, %v162, 0
    %v213 = vsel %vm190, %v163, 0
    %v216 = vsel %vm190, %v164, 0
    %v219 = vsel %vm190, %v165, 0
    %v222 = vsel %vm190, %v166, 0
    %v225 = vsel %vm190, %v167, 0
    %v228 = vsel %vm190, %v168, 0
    %v231 = vsel %vm190, %v169, 0
    %v234 = vsel %vm190, %v170, 0
    %v237 = vsel %vm190, %v171, 0
    %239 = vmatpush.bf16.msra.mxu0 0
    %240 = vmatpush.bf16.msra.mxu0 0
    %241 = vmatpush.bf16.msra.mxu0 0
    %242 = vmatpush.bf16.msra.mxu0 0
    %243 = vmatpush.bf16.msra.mxu0 0
    %244 = vmatpush.bf16.msra.mxu0 %v186
    %245 = vmatpush.bf16.msra.mxu0 %v185
    %246 = vmatpush.bf16.msra.mxu0 %v184
    %247 = vmatmul.bf16.gmra.mxu0 %v192
    %v248 = vpop.f32.mrf.mxu0
    %v249 = vadd.f32 %v90, %v248
    %v250 = vpop.f32.mrf.mxu0
    %v251 = vadd.f32 %v90, %v250
    %252 = vmatmul.bf16.gmra.mxu0 %v195
    %v253 = vpop.f32.mrf.mxu0
    %v254 = vadd.f32 %v90, %v253
    %v255 = vpop.f32.mrf.mxu0
    %v256 = vadd.f32 %v90, %v255
    %257 = vmatmul.bf16.gmra.mxu0 %v198
    %v258 = vpop.f32.mrf.mxu0
    %v259 = vadd.f32 %v90, %v258
    %v260 = vpop.f32.mrf.mxu0
    %v261 = vadd.f32 %v90, %v260
    %262 = vmatmul.bf16.gmra.mxu0 %v201
    %v263 = vpop.f32.mrf.mxu0
    %v264 = vadd.f32 %v90, %v263
    %v265 = vpop.f32.mrf.mxu0
    %v266 = vadd.f32 %v90, %v265
    %267 = vmatmul.bf16.gmra.mxu0 %v204
    %v268 = vpop.f32.mrf.mxu0
    %v269 = vadd.f32 %v90, %v268
    %v270 = vpop.f32.mrf.mxu0
    %v271 = vadd.f32 %v90, %v270
    %272 = vmatmul.bf16.gmra.mxu0 %v207
    %v273 = vpop.f32.mrf.mxu0
    %v274 = vadd.f32 %v90, %v273
    %v275 = vpop.f32.mrf.mxu0
    %v276 = vadd.f32 %v90, %v275
    %277 = vmatmul.bf16.gmra.mxu0 %v210
    %v278 = vpop.f32.mrf.mxu0
    %v279 = vadd.f32 %v90, %v278
    %v280 = vpop.f32.mrf.mxu0
    %v281 = vadd.f32 %v90, %v280
    %282 = vmatmul.bf16.gmra.mxu0 %v213
    %v283 = vpop.f32.mrf.mxu0
    %v284 = vadd.f32 %v90, %v283
    %v285 = vpop.f32.mrf.mxu0
    %v286 = vadd.f32 %v90, %v285
    %287 = vmatmul.bf16.gmra.mxu0 %v216
    %v288 = vpop.f32.mrf.mxu0
    %v289 = vadd.f32 %v90, %v288
    %v290 = vpop.f32.mrf.mxu0
    %v291 = vadd.f32 %v90, %v290
    %292 = vmatmul.bf16.gmra.mxu0 %v219
    %v293 = vpop.f32.mrf.mxu0
    %v294 = vadd.f32 %v90, %v293
    %v295 = vpop.f32.mrf.mxu0
    %v296 = vadd.f32 %v90, %v295
    %297 = vmatmul.bf16.gmra.mxu0 %v222
    %v298 = vpop.f32.mrf.mxu0
    %v299 = vadd.f32 %v90, %v298
    %v300 = vpop.f32.mrf.mxu0
    %v301 = vadd.f32 %v90, %v300
    %302 = vmatmul.bf16.gmra.mxu0 %v225
    %v303 = vpop.f32.mrf.mxu0
    %v304 = vadd.f32 %v90, %v303
    %v305 = vpop.f32.mrf.mxu0
    %v306 = vadd.f32 %v90, %v305
    %307 = vmatmul.bf16.gmra.mxu0 %v228
    %v308 = vpop.f32.mrf.mxu0
    %v309 = vadd.f32 %v90, %v308
    %v310 = vpop.f32.mrf.mxu0
    %v311 = vadd.f32 %v90, %v310
    %312 = vmatmul.bf16.gmra.mxu0 %v231
    %v313 = vpop.f32.mrf.mxu0
    %v314 = vadd.f32 %v90, %v313
    %v315 = vpop.f32.mrf.mxu0
    %v316 = vadd.f32 %v90, %v315
    %317 = vmatmul.bf16.gmra.mxu0 %v234
    %v318 = vpop.f32.mrf.mxu0
    %v319 = vadd.f32 %v90, %v318
    %v320 = vpop.f32.mrf.mxu0
    %v321 = vadd.f32 %v90, %v320
    %322 = vmatmul.bf16.gmra.mxu0 %v237
    %v323 = vpop.f32.mrf.mxu0
    %v324 = vadd.f32 %v90, %v323
    %v325 = vpop.f32.mrf.mxu0
    %v326 = vadd.f32 %v90, %v325
    %327 = vdwg.mxu0
    %v328 = vld [vmem:[%s7] sm:$0x3]
    %v329 = vpack.c.bf16 %v251, %v249
    %v330 = vpack.c.bf16 %v256, %v254
    %v331 = vpack.c.bf16 %v261, %v259
    %v332 = vpack.c.bf16 %v266, %v264
    %v333 = vpack.c.bf16 %v271, %v269
    %v334 = vpack.c.bf16 %v276, %v274
    %v335 = vpack.c.bf16 %v281, %v279
    %v336 = vpack.c.bf16 %v286, %v284
    %v337 = vpack.c.bf16 %v291, %v289
    %v338 = vpack.c.bf16 %v296, %v294
    %v339 = vpack.c.bf16 %v301, %v299
    %v340 = vpack.c.bf16 %v306, %v304
    %v341 = vpack.c.bf16 %v311, %v309
    %v342 = vpack.c.bf16 %v316, %v314
    %v343 = vpack.c.bf16 %v321, %v319
    %v344 = vpack.c.bf16 %v326, %v324
    %v345 = vld [vmem:[%s8] sm:$0xf]
    %347 = vset.pattern.permute.xlu0 0
    %348 = vperm.xlu0 %347, %v345
    %v349 = vpop.permute.xlu0 %348
    %vm351 = vcmask 130048
    %v353 = vsel %vm351, %v328, 0
    %v356 = vsel %vm351, %v329, 0
    %v359 = vsel %vm351, %v330, 0
    %v362 = vsel %vm351, %v331, 0
    %v365 = vsel %vm351, %v332, 0
    %v368 = vsel %vm351, %v333, 0
    %v371 = vsel %vm351, %v334, 0
    %v374 = vsel %vm351, %v335, 0
    %v377 = vsel %vm351, %v336, 0
    %v380 = vsel %vm351, %v337, 0
    %v383 = vsel %vm351, %v338, 0
    %v386 = vsel %vm351, %v339, 0
    %v389 = vsel %vm351, %v340, 0
    %v392 = vsel %vm351, %v341, 0
    %v395 = vsel %vm351, %v342, 0
    %v398 = vsel %vm351, %v343, 0
    %v401 = vsel %vm351, %v344, 0
    %403 = vmatpush.bf16.xpose.msra.mxu0 %v377
    %404 = vmatpush.bf16.xpose.msra.mxu0 %v374
    %405 = vmatpush.bf16.xpose.msra.mxu0 %v371
    %406 = vmatpush.bf16.xpose.msra.mxu0 %v368
    %407 = vmatpush.bf16.xpose.msra.mxu0 %v365
    %408 = vmatpush.bf16.xpose.msra.mxu0 %v362
    %409 = vmatpush.bf16.xpose.msra.mxu0 %v359
    %410 = vmatpush.bf16.xpose.msra.mxu0 %v356
    %411 = vmatmul.bf16.gmra.mxu0 %v353
    %v412 = vpop.f32.mrf.mxu0
    %v413 = vadd.f32 %v349, %v412
    %v414 = vpop.f32.mrf.mxu0
    %415 = vdwg.mxu0
    %416 = vmatpush.bf16.xpose.msra.mxu0 %v401
    %417 = vmatpush.bf16.xpose.msra.mxu0 %v398
    %418 = vmatpush.bf16.xpose.msra.mxu0 %v395
    %419 = vmatpush.bf16.xpose.msra.mxu0 %v392
    %420 = vmatpush.bf16.xpose.msra.mxu0 %v389
    %421 = vmatpush.bf16.xpose.msra.mxu0 %v386
    %422 = vmatpush.bf16.xpose.msra.mxu0 %v383
    %423 = vmatpush.bf16.xpose.msra.mxu0 %v380
    %424 = vmatmul.bf16.gmra.mxu0 %v353
    %v425 = vpop.f32.mrf.mxu0
    %v426 = vadd.f32 %v349, %v425
    %v427 = vpop.f32.mrf.mxu0
    %428 = vdwg.mxu0
    %v431 = vrot.slane %v426, 4
    %vm432 = vcmask 1043456
    %v433 = vsel %vm432, %v413, %v431
    %435 = vst [vmem:[#allocation2] sm:$0xff] %v433
    %v468 = vrot.slane %v249, 2
    %v469 = vrot.slane %v249, 4
    %v470 = vrot.slane %v249, 6
    %v471 = vrot.slane %v251, 2
    %v472 = vrot.slane %v251, 4
    %v473 = vrot.slane %v251, 6
    %v474 = vrot.slane %v254, 2
    %v475 = vrot.slane %v254, 4
    %v476 = vrot.slane %v254, 6
    %v477 = vrot.slane %v256, 2
    %v478 = vrot.slane %v256, 4
    %v479 = vrot.slane %v256, 6
    %v480 = vrot.slane %v259, 2
    %v481 = vrot.slane %v259, 4
    %v482 = vrot.slane %v259, 6
    %v483 = vrot.slane %v261, 2
    %v484 = vrot.slane %v261, 4
    %v485 = vrot.slane %v261, 6
    %v486 = vrot.slane %v264, 2
    %v487 = vrot.slane %v264, 4
    %v488 = vrot.slane %v264, 6
    %v489 = vrot.slane %v266, 2
    %v490 = vrot.slane %v266, 4
    %v491 = vrot.slane %v266, 6
    %v492 = vrot.slane %v269, 2
    %v493 = vrot.slane %v269, 4
    %v494 = vrot.slane %v269, 6
    %v495 = vrot.slane %v271, 2
    %v496 = vrot.slane %v271, 4
    %v497 = vrot.slane %v271, 6
    %v498 = vrot.slane %v274, 2
    %v499 = vrot.slane %v274, 4
    %v500 = vrot.slane %v274, 6
    %v501 = vrot.slane %v276, 2
    %v502 = vrot.slane %v276, 4
    %v503 = vrot.slane %v276, 6
    %v504 = vrot.slane %v279, 2
    %v505 = vrot.slane %v279, 4
    %v506 = vrot.slane %v279, 6
    %v507 = vrot.slane %v281, 2
    %v508 = vrot.slane %v281, 4
    %v509 = vrot.slane %v281, 6
    %v510 = vrot.slane %v284, 2
    %v511 = vrot.slane %v284, 4
    %v512 = vrot.slane %v284, 6
    %v513 = vrot.slane %v286, 2
    %v514 = vrot.slane %v286, 4
    %v515 = vrot.slane %v286, 6
    %v516 = vrot.slane %v289, 2
    %v517 = vrot.slane %v289, 4
    %v518 = vrot.slane %v289, 6
    %v519 = vrot.slane %v291, 2
    %v520 = vrot.slane %v291, 4
    %v521 = vrot.slane %v291, 6
    %v522 = vrot.slane %v294, 2
    %v523 = vrot.slane %v294, 4
    %v524 = vrot.slane %v294, 6
    %v525 = vrot.slane %v296, 2
    %v526 = vrot.slane %v296, 4
    %v527 = vrot.slane %v296, 6
    %v528 = vrot.slane %v299, 2
    %v529 = vrot.slane %v299, 4
    %v530 = vrot.slane %v299, 6
    %v531 = vrot.slane %v301, 2
    %v532 = vrot.slane %v301, 4
    %v533 = vrot.slane %v301, 6
    %v534 = vrot.slane %v304, 2
    %v535 = vrot.slane %v304, 4
    %v536 = vrot.slane %v304, 6
    %v537 = vrot.slane %v306, 2
    %v538 = vrot.slane %v306, 4
    %v539 = vrot.slane %v306, 6
    %v540 = vrot.slane %v309, 2
    %v541 = vrot.slane %v309, 4
    %v542 = vrot.slane %v309, 6
    %v543 = vrot.slane %v311, 2
    %v544 = vrot.slane %v311, 4
    %v545 = vrot.slane %v311, 6
    %v546 = vrot.slane %v314, 2
    %v547 = vrot.slane %v314, 4
    %v548 = vrot.slane %v314, 6
    %v549 = vrot.slane %v316, 2
    %v550 = vrot.slane %v316, 4
    %v551 = vrot.slane %v316, 6
    %v552 = vrot.slane %v319, 2
    %v553 = vrot.slane %v319, 4
    %v554 = vrot.slane %v319, 6
    %v555 = vrot.slane %v321, 2
    %v556 = vrot.slane %v321, 4
    %v557 = vrot.slane %v321, 6
    %v558 = vrot.slane %v324, 2
    %v559 = vrot.slane %v324, 4
    %v560 = vrot.slane %v324, 6
    %v561 = vrot.slane %v326, 2
    %v562 = vrot.slane %v326, 4
    %v563 = vrot.slane %v326, 6
    %v564 = vperm.slane %v249, 0
    %v565 = vperm.slane %v468, 0
    %v566 = vperm.slane %v469, 0
    %v567 = vperm.slane %v470, 0
    %v568 = vperm.slane %v251, 0
    %v569 = vperm.slane %v471, 0
    %v570 = vperm.slane %v472, 0
    %v571 = vperm.slane %v473, 0
    %v572 = vperm.slane %v259, 0
    %v573 = vperm.slane %v480, 0
    %v574 = vperm.slane %v481, 0
    %v575 = vperm.slane %v482, 0
    %v576 = vperm.slane %v261, 0
    %v577 = vperm.slane %v483, 0
    %v578 = vperm.slane %v484, 0
    %v579 = vperm.slane %v485, 0
    %v580 = vperm.slane %v269, 0
    %v581 = vperm.slane %v492, 0
    %v582 = vperm.slane %v493, 0
    %v583 = vperm.slane %v494, 0
    %v584 = vperm.slane %v271, 0
    %v585 = vperm.slane %v495, 0
    %v586 = vperm.slane %v496, 0
    %v587 = vperm.slane %v497, 0
    %v588 = vperm.slane %v279, 0
    %v589 = vperm.slane %v504, 0
    %v590 = vperm.slane %v505, 0
    %v591 = vperm.slane %v506, 0
    %v592 = vperm.slane %v281, 0
    %v593 = vperm.slane %v507, 0
    %v594 = vperm.slane %v508, 0
    %v595 = vperm.slane %v509, 0
    %v596 = vperm.slane %v289, 0
    %v597 = vperm.slane %v516, 0
    %v598 = vperm.slane %v517, 0
    %v599 = vperm.slane %v518, 0
    %v600 = vperm.slane %v291, 0
    %v601 = vperm.slane %v519, 0
    %v602 = vperm.slane %v520, 0
    %v603 = vperm.slane %v521, 0
    %v604 = vperm.slane %v299, 0
    %v605 = vperm.slane %v528, 0
    %v606 = vperm.slane %v529, 0
    %v607 = vperm.slane %v530, 0
    %v608 = vperm.slane %v301, 0
    %v609 = vperm.slane %v531, 0
    %v610 = vperm.slane %v532, 0
    %v611 = vperm.slane %v533, 0
    %v612 = vperm.slane %v309, 0
    %v613 = vperm.slane %v540, 0
    %v614 = vperm.slane %v541, 0
    %v615 = vperm.slane %v542, 0
    %v616 = vperm.slane %v311, 0
    %v617 = vperm.slane %v543, 0
    %v618 = vperm.slane %v544, 0
    %v619 = vperm.slane %v545, 0
    %v620 = vperm.slane %v319, 0
    %v621 = vperm.slane %v552, 0
    %v622 = vperm.slane %v553, 0
    %v623 = vperm.slane %v554, 0
    %v624 = vperm.slane %v321, 0
    %v625 = vperm.slane %v555, 0
    %v626 = vperm.slane %v556, 0
    %v627 = vperm.slane %v557, 0
    %vm628 = vcmask 1041409
    %v629 = vsel %vm628, %v565, %v564
    %vm630 = vcmask 1042434
    %v631 = vsel %vm630, %v566, %v629
    %vm632 = vcmask 1043459
    %v633 = vsel %vm632, %v567, %v631
    %vm634 = vcmask 1044484
    %v635 = vsel %vm634, %v568, %v633
    %vm636 = vcmask 1045509
    %v637 = vsel %vm636, %v569, %v635
    %vm638 = vcmask 1046534
    %v639 = vsel %vm638, %v570, %v637
    %vm640 = vcmask 1047559
    %v641 = vsel %vm640, %v571, %v639
    %v642 = vsel %vm628, %v573, %v572
    %v643 = vsel %vm630, %v574, %v642
    %v644 = vsel %vm632, %v575, %v643
    %v645 = vsel %vm634, %v576, %v644
    %v646 = vsel %vm636, %v577, %v645
    %v647 = vsel %vm638, %v578, %v646
    %v648 = vsel %vm640, %v579, %v647
    %v649 = vsel %vm628, %v581, %v580
    %v650 = vsel %vm630, %v582, %v649
    %v651 = vsel %vm632, %v583, %v650
    %v652 = vsel %vm634, %v584, %v651
    %v653 = vsel %vm636, %v585, %v652
    %v654 = vsel %vm638, %v586, %v653
    %v655 = vsel %vm640, %v587, %v654
    %v656 = vsel %vm628, %v589, %v588
    %v657 = vsel %vm630, %v590, %v656
    %v658 = vsel %vm632, %v591, %v657
    %v659 = vsel %vm634, %v592, %v658
    %v660 = vsel %vm636, %v593, %v659
    %v661 = vsel %vm638, %v594, %v660
    %v662 = vsel %vm640, %v595, %v661
    %v663 = vsel %vm628, %v597, %v596
    %v664 = vsel %vm630, %v598, %v663
    %v665 = vsel %vm632, %v599, %v664
    %v666 = vsel %vm634, %v600, %v665
    %v667 = vsel %vm636, %v601, %v666
    %v668 = vsel %vm638, %v602, %v667
    %v669 = vsel %vm640, %v603, %v668
    %v670 = vsel %vm628, %v605, %v604
    %v671 = vsel %vm630, %v606, %v670
    %v672 = vsel %vm632, %v607, %v671
    %v673 = vsel %vm634, %v608, %v672
    %v674 = vsel %vm636, %v609, %v673
    %v675 = vsel %vm638, %v610, %v674
    %v676 = vsel %vm640, %v611, %v675
    %v677 = vsel %vm628, %v613, %v612
    %v678 = vsel %vm630, %v614, %v677
    %v679 = vsel %vm632, %v615, %v678
    %v680 = vsel %vm634, %v616, %v679
    %v681 = vsel %vm636, %v617, %v680
    %v682 = vsel %vm638, %v618, %v681
    %v683 = vsel %vm640, %v619, %v682
    %v684 = vsel %vm628, %v621, %v620
    %v685 = vsel %vm630, %v622, %v684
    %v686 = vsel %vm632, %v623, %v685
    %v687 = vsel %vm634, %v624, %v686
    %v688 = vsel %vm636, %v625, %v687
    %v689 = vsel %vm638, %v626, %v688
    %v690 = vsel %vm640, %v627, %v689
    %v699 = vperm.slane %v249, 1
    %v700 = vperm.slane %v468, 1
    %v701 = vperm.slane %v469, 1
    %v702 = vperm.slane %v470, 1
    %v703 = vperm.slane %v251, 1
    %v704 = vperm.slane %v471, 1
    %v705 = vperm.slane %v472, 1
    %v706 = vperm.slane %v473, 1
    %v707 = vperm.slane %v259, 1
    %v708 = vperm.slane %v480, 1
    %v709 = vperm.slane %v481, 1
    %v710 = vperm.slane %v482, 1
    %v711 = vperm.slane %v261, 1
    %v712 = vperm.slane %v483, 1
    %v713 = vperm.slane %v484, 1
    %v714 = vperm.slane %v485, 1
    %v715 = vperm.slane %v269, 1
    %v716 = vperm.slane %v492, 1
    %v717 = vperm.slane %v493, 1
    %v718 = vperm.slane %v494, 1
    %v719 = vperm.slane %v271, 1
    %v720 = vperm.slane %v495, 1
    %v721 = vperm.slane %v496, 1
    %v722 = vperm.slane %v497, 1
    %v723 = vperm.slane %v279, 1
    %v724 = vperm.slane %v504, 1
    %v725 = vperm.slane %v505, 1
    %v726 = vperm.slane %v506, 1
    %v727 = vperm.slane %v281, 1
    %v728 = vperm.slane %v507, 1
    %v729 = vperm.slane %v508, 1
    %v730 = vperm.slane %v509, 1
    %v731 = vperm.slane %v289, 1
    %v732 = vperm.slane %v516, 1
    %v733 = vperm.slane %v517, 1
    %v734 = vperm.slane %v518, 1
    %v735 = vperm.slane %v291, 1
    %v736 = vperm.slane %v519, 1
    %v737 = vperm.slane %v520, 1
    %v738 = vperm.slane %v521, 1
    %v739 = vperm.slane %v299, 1
    %v740 = vperm.slane %v528, 1
    %v741 = vperm.slane %v529, 1
    %v742 = vperm.slane %v530, 1
    %v743 = vperm.slane %v301, 1
    %v744 = vperm.slane %v531, 1
    %v745 = vperm.slane %v532, 1
    %v746 = vperm.slane %v533, 1
    %v747 = vperm.slane %v309, 1
    %v748 = vperm.slane %v540, 1
    %v749 = vperm.slane %v541, 1
    %v750 = vperm.slane %v542, 1
    %v751 = vperm.slane %v311, 1
    %v752 = vperm.slane %v543, 1
    %v753 = vperm.slane %v544, 1
    %v754 = vperm.slane %v545, 1
    %v755 = vperm.slane %v319, 1
    %v756 = vperm.slane %v552, 1
    %v757 = vperm.slane %v553, 1
    %v758 = vperm.slane %v554, 1
    %v759 = vperm.slane %v321, 1
    %v760 = vperm.slane %v555, 1
    %v761 = vperm.slane %v556, 1
    %v762 = vperm.slane %v557, 1
    %v763 = vsel %vm628, %v700, %v699
    %v764 = vsel %vm630, %v701, %v763
    %v765 = vsel %vm632, %v702, %v764
    %v766 = vsel %vm634, %v703, %v765
    %v767 = vsel %vm636, %v704, %v766
    %v768 = vsel %vm638, %v705, %v767
    %v769 = vsel %vm640, %v706, %v768
    %v770 = vsel %vm628, %v708, %v707
    %v771 = vsel %vm630, %v709, %v770
    %v772 = vsel %vm632, %v710, %v771
    %v773 = vsel %vm634, %v711, %v772
    %v774 = vsel %vm636, %v712, %v773
    %v775 = vsel %vm638, %v713, %v774
    %v776 = vsel %vm640, %v714, %v775
    %v777 = vsel %vm628, %v716, %v715
    %v778 = vsel %vm630, %v717, %v777
    %v779 = vsel %vm632, %v718, %v778
    %v780 = vsel %vm634, %v719, %v779
    %v781 = vsel %vm636, %v720, %v780
    %v782 = vsel %vm638, %v721, %v781
    %v783 = vsel %vm640, %v722, %v782
    %v784 = vsel %vm628, %v724, %v723
    %v785 = vsel %vm630, %v725, %v784
    %v786 = vsel %vm632, %v726, %v785
    %v787 = vsel %vm634, %v727, %v786
    %v788 = vsel %vm636, %v728, %v787
    %v789 = vsel %vm638, %v729, %v788
    %v790 = vsel %vm640, %v730, %v789
    %v791 = vsel %vm628, %v732, %v731
    %v792 = vsel %vm630, %v733, %v791
    %v793 = vsel %vm632, %v734, %v792
    %v794 = vsel %vm634, %v735, %v793
    %v795 = vsel %vm636, %v736, %v794
    %v796 = vsel %vm638, %v737, %v795
    %v797 = vsel %vm640, %v738, %v796
    %v798 = vsel %vm628, %v740, %v739
    %v799 = vsel %vm630, %v741, %v798
    %v800 = vsel %vm632, %v742, %v799
    %v801 = vsel %vm634, %v743, %v800
    %v802 = vsel %vm636, %v744, %v801
    %v803 = vsel %vm638, %v745, %v802
    %v804 = vsel %vm640, %v746, %v803
    %v805 = vsel %vm628, %v748, %v747
    %v806 = vsel %vm630, %v749, %v805
    %v807 = vsel %vm632, %v750, %v806
    %v808 = vsel %vm634, %v751, %v807
    %v809 = vsel %vm636, %v752, %v808
    %v810 = vsel %vm638, %v753, %v809
    %v811 = vsel %vm640, %v754, %v810
    %v812 = vsel %vm628, %v756, %v755
    %v813 = vsel %vm630, %v757, %v812
    %v814 = vsel %vm632, %v758, %v813
    %v815 = vsel %vm634, %v759, %v814
    %v816 = vsel %vm636, %v760, %v815
    %v817 = vsel %vm638, %v761, %v816
    %v818 = vsel %vm640, %v762, %v817
    %819 = vrot.lane.b32.xlu0 %v769, 16
    %v820 = vpop.permute.xlu0 %819
    %821 = vrot.lane.b32.xlu0 %v776, 16
    %v822 = vpop.permute.xlu0 %821
    %823 = vrot.lane.b32.xlu0 %v783, 16
    %v824 = vpop.permute.xlu0 %823
    %825 = vrot.lane.b32.xlu0 %v790, 16
    %v826 = vpop.permute.xlu0 %825
    %827 = vrot.lane.b32.xlu0 %v797, 16
    %v828 = vpop.permute.xlu0 %827
    %829 = vrot.lane.b32.xlu0 %v804, 16
    %v830 = vpop.permute.xlu0 %829
    %831 = vrot.lane.b32.xlu0 %v811, 16
    %v832 = vpop.permute.xlu0 %831
    %833 = vrot.lane.b32.xlu0 %v818, 16
    %v834 = vpop.permute.xlu0 %833
    %v843 = vperm.slane %v254, 0
    %v844 = vperm.slane %v474, 0
    %v845 = vperm.slane %v475, 0
    %v846 = vperm.slane %v476, 0
    %v847 = vperm.slane %v256, 0
    %v848 = vperm.slane %v477, 0
    %v849 = vperm.slane %v478, 0
    %v850 = vperm.slane %v479, 0
    %v851 = vperm.slane %v264, 0
    %v852 = vperm.slane %v486, 0
    %v853 = vperm.slane %v487, 0
    %v854 = vperm.slane %v488, 0
    %v855 = vperm.slane %v266, 0
    %v856 = vperm.slane %v489, 0
    %v857 = vperm.slane %v490, 0
    %v858 = vperm.slane %v491, 0
    %v859 = vperm.slane %v274, 0
    %v860 = vperm.slane %v498, 0
    %v861 = vperm.slane %v499, 0
    %v862 = vperm.slane %v500, 0
    %v863 = vperm.slane %v276, 0
    %v864 = vperm.slane %v501, 0
    %v865 = vperm.slane %v502, 0
    %v866 = vperm.slane %v503, 0
    %v867 = vperm.slane %v284, 0
    %v868 = vperm.slane %v510, 0
    %v869 = vperm.slane %v511, 0
    %v870 = vperm.slane %v512, 0
    %v871 = vperm.slane %v286, 0
    %v872 = vperm.slane %v513, 0
    %v873 = vperm.slane %v514, 0
    %v874 = vperm.slane %v515, 0
    %v875 = vperm.slane %v294, 0
    %v876 = vperm.slane %v522, 0
    %v877 = vperm.slane %v523, 0
    %v878 = vperm.slane %v524, 0
    %v879 = vperm.slane %v296, 0
    %v880 = vperm.slane %v525, 0
    %v881 = vperm.slane %v526, 0
    %v882 = vperm.slane %v527, 0
    %v883 = vperm.slane %v304, 0
    %v884 = vperm.slane %v534, 0
    %v885 = vperm.slane %v535, 0
    %v886 = vperm.slane %v536, 0
    %v887 = vperm.slane %v306, 0
    %v888 = vperm.slane %v537, 0
    %v889 = vperm.slane %v538, 0
    %v890 = vperm.slane %v539, 0
    %v891 = vperm.slane %v314, 0
    %v892 = vperm.slane %v546, 0
    %v893 = vperm.slane %v547, 0
    %v894 = vperm.slane %v548, 0
    %v895 = vperm.slane %v316, 0
    %v896 = vperm.slane %v549, 0
    %v897 = vperm.slane %v550, 0
    %v898 = vperm.slane %v551, 0
    %v899 = vperm.slane %v324, 0
    %v900 = vperm.slane %v558, 0
    %v901 = vperm.slane %v559, 0
    %v902 = vperm.slane %v560, 0
    %v903 = vperm.slane %v326, 0
    %v904 = vperm.slane %v561, 0
    %v905 = vperm.slane %v562, 0
    %v906 = vperm.slane %v563, 0
    %v907 = vsel %vm628, %v844, %v843
    %v908 = vsel %vm630, %v845, %v907
    %v909 = vsel %vm632, %v846, %v908
    %v910 = vsel %vm634, %v847, %v909
    %v911 = vsel %vm636, %v848, %v910
    %v912 = vsel %vm638, %v849, %v911
    %v913 = vsel %vm640, %v850, %v912
    %v914 = vsel %vm628, %v852, %v851
    %v915 = vsel %vm630, %v853, %v914
    %v916 = vsel %vm632, %v854, %v915
    %v917 = vsel %vm634, %v855, %v916
    %v918 = vsel %vm636, %v856, %v917
    %v919 = vsel %vm638, %v857, %v918
    %v920 = vsel %vm640, %v858, %v919
    %v921 = vsel %vm628, %v860, %v859
    %v922 = vsel %vm630, %v861, %v921
    %v923 = vsel %vm632, %v862, %v922
    %v924 = vsel %vm634, %v863, %v923
    %v925 = vsel %vm636, %v864, %v924
    %v926 = vsel %vm638, %v865, %v925
    %v927 = vsel %vm640, %v866, %v926
    %v928 = vsel %vm628, %v868, %v867
    %v929 = vsel %vm630, %v869, %v928
    %v930 = vsel %vm632, %v870, %v929
    %v931 = vsel %vm634, %v871, %v930
    %v932 = vsel %vm636, %v872, %v931
    %v933 = vsel %vm638, %v873, %v932
    %v934 = vsel %vm640, %v874, %v933
    %v935 = vsel %vm628, %v876, %v875
    %v936 = vsel %vm630, %v877, %v935
    %v937 = vsel %vm632, %v878, %v936
    %v938 = vsel %vm634, %v879, %v937
    %v939 = vsel %vm636, %v880, %v938
    %v940 = vsel %vm638, %v881, %v939
    %v941 = vsel %vm640, %v882, %v940
    %v942 = vsel %vm628, %v884, %v883
    %v943 = vsel %vm630, %v885, %v942
    %v944 = vsel %vm632, %v886, %v943
    %v945 = vsel %vm634, %v887, %v944
    %v946 = vsel %vm636, %v888, %v945
    %v947 = vsel %vm638, %v889, %v946
    %v948 = vsel %vm640, %v890, %v947
    %v949 = vsel %vm628, %v892, %v891
    %v950 = vsel %vm630, %v893, %v949
    %v951 = vsel %vm632, %v894, %v950
    %v952 = vsel %vm634, %v895, %v951
    %v953 = vsel %vm636, %v896, %v952
    %v954 = vsel %vm638, %v897, %v953
    %v955 = vsel %vm640, %v898, %v954
    %v956 = vsel %vm628, %v900, %v899
    %v957 = vsel %vm630, %v901, %v956
    %v958 = vsel %vm632, %v902, %v957
    %v959 = vsel %vm634, %v903, %v958
    %v960 = vsel %vm636, %v904, %v959
    %v961 = vsel %vm638, %v905, %v960
    %v962 = vsel %vm640, %v906, %v961
    %963 = vrot.lane.b32.xlu0 %v913, 32
    %v964 = vpop.permute.xlu0 %963
    %965 = vrot.lane.b32.xlu0 %v920, 32
    %v966 = vpop.permute.xlu0 %965
    %967 = vrot.lane.b32.xlu0 %v927, 32
    %v968 = vpop.permute.xlu0 %967
    %969 = vrot.lane.b32.xlu0 %v934, 32
    %v970 = vpop.permute.xlu0 %969
    %971 = vrot.lane.b32.xlu0 %v941, 32
    %v972 = vpop.permute.xlu0 %971
    %973 = vrot.lane.b32.xlu0 %v948, 32
    %v974 = vpop.permute.xlu0 %973
    %975 = vrot.lane.b32.xlu0 %v955, 32
    %v976 = vpop.permute.xlu0 %975
    %977 = vrot.lane.b32.xlu0 %v962, 32
    %v978 = vpop.permute.xlu0 %977
    %v987 = vperm.slane %v254, 1
    %v988 = vperm.slane %v474, 1
    %v989 = vperm.slane %v475, 1
    %v990 = vperm.slane %v476, 1
    %v991 = vperm.slane %v256, 1
    %v992 = vperm.slane %v477, 1
    %v993 = vperm.slane %v478, 1
    %v994 = vperm.slane %v479, 1
    %v995 = vperm.slane %v264, 1
    %v996 = vperm.slane %v486, 1
    %v997 = vperm.slane %v487, 1
    %v998 = vperm.slane %v488, 1
    %v999 = vperm.slane %v266, 1
    %v1000 = vperm.slane %v489, 1
    %v1001 = vperm.slane %v490, 1
    %v1002 = vperm.slane %v491, 1
    %v1003 = vperm.slane %v274, 1
    %v1004 = vperm.slane %v498, 1
    %v1005 = vperm.slane %v499, 1
    %v1006 = vperm.slane %v500, 1
    %v1007 = vperm.slane %v276, 1
    %v1008 = vperm.slane %v501, 1
    %v1009 = vperm.slane %v502, 1
    %v1010 = vperm.slane %v503, 1
    %v1011 = vperm.slane %v284, 1
    %v1012 = vperm.slane %v510, 1
    %v1013 = vperm.slane %v511, 1
    %v1014 = vperm.slane %v512, 1
    %v1015 = vperm.slane %v286, 1
    %v1016 = vperm.slane %v513, 1
    %v1017 = vperm.slane %v514, 1
    %v1018 = vperm.slane %v515, 1
    %v1019 = vperm.slane %v294, 1
    %v1020 = vperm.slane %v522, 1
    %v1021 = vperm.slane %v523, 1
    %v1022 = vperm.slane %v524, 1
    %v1023 = vperm.slane %v296, 1
    %v1024 = vperm.slane %v525, 1
    %v1025 = vperm.slane %v526, 1
    %v1026 = vperm.slane %v527, 1
    %v1027 = vperm.slane %v304, 1
    %v1028 = vperm.slane %v534, 1
    %v1029 = vperm.slane %v535, 1
    %v1030 = vperm.slane %v536, 1
    %v1031 = vperm.slane %v306, 1
    %v1032 = vperm.slane %v537, 1
    %v1033 = vperm.slane %v538, 1
    %v1034 = vperm.slane %v539, 1
    %v1035 = vperm.slane %v314, 1
    %v1036 = vperm.slane %v546, 1
    %v1037 = vperm.slane %v547, 1
    %v1038 = vperm.slane %v548, 1
    %v1039 = vperm.slane %v316, 1
    %v1040 = vperm.slane %v549, 1
    %v1041 = vperm.slane %v550, 1
    %v1042 = vperm.slane %v551, 1
    %v1043 = vperm.slane %v324, 1
    %v1044 = vperm.slane %v558, 1
    %v1045 = vperm.slane %v559, 1
    %v1046 = vperm.slane %v560, 1
    %v1047 = vperm.slane %v326, 1
    %v1048 = vperm.slane %v561, 1
    %v1049 = vperm.slane %v562, 1
    %v1050 = vperm.slane %v563, 1
    %v1051 = vsel %vm628, %v988, %v987
    %v1052 = vsel %vm630, %v989, %v1051
    %v1053 = vsel %vm632, %v990, %v1052
    %v1054 = vsel %vm634, %v991, %v1053
    %v1055 = vsel %vm636, %v992, %v1054
    %v1056 = vsel %vm638, %v993, %v1055
    %v1057 = vsel %vm640, %v994, %v1056
    %v1058 = vsel %vm628, %v996, %v995
    %v1059 = vsel %vm630, %v997, %v1058
    %v1060 = vsel %vm632, %v998, %v1059
    %v1061 = vsel %vm634, %v999, %v1060
    %v1062 = vsel %vm636, %v1000, %v1061
    %v1063 = vsel %vm638, %v1001, %v1062
    %v1064 = vsel %vm640, %v1002, %v1063
    %v1065 = vsel %vm628, %v1004, %v1003
    %v1066 = vsel %vm630, %v1005, %v1065
    %v1067 = vsel %vm632, %v1006, %v1066
    %v1068 = vsel %vm634, %v1007, %v1067
    %v1069 = vsel %vm636, %v1008, %v1068
    %v1070 = vsel %vm638, %v1009, %v1069
    %v1071 = vsel %vm640, %v1010, %v1070
    %v1072 = vsel %vm628, %v1012, %v1011
    %v1073 = vsel %vm630, %v1013, %v1072
    %v1074 = vsel %vm632, %v1014, %v1073
    %v1075 = vsel %vm634, %v1015, %v1074
    %v1076 = vsel %vm636, %v1016, %v1075
    %v1077 = vsel %vm638, %v1017, %v1076
    %v1078 = vsel %vm640, %v1018, %v1077
    %v1079 = vsel %vm628, %v1020, %v1019
    %v1080 = vsel %vm630, %v1021, %v1079
    %v1081 = vsel %vm632, %v1022, %v1080
    %v1082 = vsel %vm634, %v1023, %v1081
    %v1083 = vsel %vm636, %v1024, %v1082
    %v1084 = vsel %vm638, %v1025, %v1083
    %v1085 = vsel %vm640, %v1026, %v1084
    %v1086 = vsel %vm628, %v1028, %v1027
    %v1087 = vsel %vm630, %v1029, %v1086
    %v1088 = vsel %vm632, %v1030, %v1087
    %v1089 = vsel %vm634, %v1031, %v1088
    %v1090 = vsel %vm636, %v1032, %v1089
    %v1091 = vsel %vm638, %v1033, %v1090
    %v1092 = vsel %vm640, %v1034, %v1091
    %v1093 = vsel %vm628, %v1036, %v1035
    %v1094 = vsel %vm630, %v1037, %v1093
    %v1095 = vsel %vm632, %v1038, %v1094
    %v1096 = vsel %vm634, %v1039, %v1095
    %v1097 = vsel %vm636, %v1040, %v1096
    %v1098 = vsel %vm638, %v1041, %v1097
    %v1099 = vsel %vm640, %v1042, %v1098
    %v1100 = vsel %vm628, %v1044, %v1043
    %v1101 = vsel %vm630, %v1045, %v1100
    %v1102 = vsel %vm632, %v1046, %v1101
    %v1103 = vsel %vm634, %v1047, %v1102
    %v1104 = vsel %vm636, %v1048, %v1103
    %v1105 = vsel %vm638, %v1049, %v1104
    %v1106 = vsel %vm640, %v1050, %v1105
    %1107 = vrot.lane.b32.xlu0 %v1057, 48
    %v1108 = vpop.permute.xlu0 %1107
    %1109 = vrot.lane.b32.xlu0 %v1064, 48
    %v1110 = vpop.permute.xlu0 %1109
    %1111 = vrot.lane.b32.xlu0 %v1071, 48
    %v1112 = vpop.permute.xlu0 %1111
    %1113 = vrot.lane.b32.xlu0 %v1078, 48
    %v1114 = vpop.permute.xlu0 %1113
    %1115 = vrot.lane.b32.xlu0 %v1085, 48
    %v1116 = vpop.permute.xlu0 %1115
    %1117 = vrot.lane.b32.xlu0 %v1092, 48
    %v1118 = vpop.permute.xlu0 %1117
    %1119 = vrot.lane.b32.xlu0 %v1099, 48
    %v1120 = vpop.permute.xlu0 %1119
    %1121 = vrot.lane.b32.xlu0 %v1106, 48
    %v1122 = vpop.permute.xlu0 %1121
    %v1131 = vsel %vm351, %v641, %v820
    %v1132 = vsel %vm351, %v648, %v822
    %v1133 = vsel %vm351, %v655, %v824
    %v1134 = vsel %vm351, %v662, %v826
    %v1135 = vsel %vm351, %v669, %v828
    %v1136 = vsel %vm351, %v676, %v830
    %v1137 = vsel %vm351, %v683, %v832
    %v1138 = vsel %vm351, %v690, %v834
    %vm1139 = vcmask 261120
    %v1140 = vsel %vm1139, %v1131, %v964
    %v1141 = vsel %vm1139, %v1132, %v966
    %v1142 = vsel %vm1139, %v1133, %v968
    %v1143 = vsel %vm1139, %v1134, %v970
    %v1144 = vsel %vm1139, %v1135, %v972
    %v1145 = vsel %vm1139, %v1136, %v974
    %v1146 = vsel %vm1139, %v1137, %v976
    %v1147 = vsel %vm1139, %v1138, %v978
    %v1148 = vsel %vm190, %v1140, %v1108
    %v1149 = vsel %vm190, %v1141, %v1110
    %v1150 = vsel %vm190, %v1142, %v1112
    %v1151 = vsel %vm190, %v1143, %v1114
    %v1152 = vsel %vm190, %v1144, %v1116
    %v1153 = vsel %vm190, %v1145, %v1118
    %v1154 = vsel %vm190, %v1146, %v1120
    %v1155 = vsel %vm190, %v1147, %v1122
    %v1156 = vpack.c.bf16 %v1149, %v1148
    %v1157 = vpack.c.bf16 %v1151, %v1150
    %v1158 = vpack.c.bf16 %v1153, %v1152
    %v1159 = vpack.c.bf16 %v1155, %v1154
    %v1160 = vld [vmem:[%s3] sm:$0xf]
    %v1161 = vld [vmem:[%s3 + $0x4] sm:$0xf]
    %v1162 = vld [vmem:[%s3 + $0x8] sm:$0xf]
    %v1163 = vld [vmem:[%s3 + $0xc] sm:$0xf]
    %v1164 = vld [vmem:[%s3 + $0x10] sm:$0xf]
    %v1165 = vld [vmem:[%s3 + $0x14] sm:$0xf]
    %v1166 = vld [vmem:[%s3 + $0x18] sm:$0xf]
    %v1167 = vld [vmem:[%s3 + $0x1c] sm:$0xf]
    %v1168 = vld [vmem:[%s4] sm:$0x1]
    %v1170 = vperm.slane %v1168, 0
    %v1180 = vunpack.c.l.b16 %v1160
    %v1181 = vunpack.c.l.b16 %v1161
    %v1182 = vunpack.c.l.b16 %v1162
    %v1183 = vunpack.c.l.b16 %v1163
    %v1184 = vunpack.c.l.b16 %v1164
    %v1185 = vunpack.c.l.b16 %v1165
    %v1186 = vunpack.c.l.b16 %v1166
    %v1187 = vunpack.c.l.b16 %v1167
    %v1188 = vpack.c.b16 %v1181, %v1180
    %v1189 = vpack.c.b16 %v1183, %v1182
    %v1190 = vpack.c.b16 %v1185, %v1184
    %v1191 = vpack.c.b16 %v1187, %v1186
    %vm1196 = vcmask 523264
    %v1198 = vsel %vm1196, %v1156, 0
    %v1201 = vsel %vm1196, %v1157, 0
    %v1204 = vsel %vm1196, %v1158, 0
    %v1207 = vsel %vm1196, %v1159, 0
    %1209 = vmatpush.bf16.msra.mxu0 0
    %1210 = vmatpush.bf16.msra.mxu0 0
    %1211 = vmatpush.bf16.msra.mxu0 0
    %1212 = vmatpush.bf16.msra.mxu0 0
    %1213 = vmatpush.bf16.msra.mxu0 %v1191
    %1214 = vmatpush.bf16.msra.mxu0 %v1190
    %1215 = vmatpush.bf16.msra.mxu0 %v1189
    %1216 = vmatpush.bf16.msra.mxu0 %v1188
    %1217 = vmatmul.bf16.gmra.mxu0 %v1198
    %v1218 = vpop.f32.mrf.mxu0
    %v1219 = vadd.f32 %v1170, %v1218
    %v1220 = vpop.f32.mrf.mxu0
    %v1221 = vadd.f32 %v1170, %v1220
    %1222 = vmatmul.bf16.gmra.mxu0 %v1201
    %v1223 = vpop.f32.mrf.mxu0
    %v1224 = vadd.f32 %v1170, %v1223
    %v1225 = vpop.f32.mrf.mxu0
    %v1226 = vadd.f32 %v1170, %v1225
    %1227 = vmatmul.bf16.gmra.mxu0 %v1204
    %v1228 = vpop.f32.mrf.mxu0
    %v1229 = vadd.f32 %v1170, %v1228
    %v1230 = vpop.f32.mrf.mxu0
    %v1231 = vadd.f32 %v1170, %v1230
    %1232 = vmatmul.bf16.gmra.mxu0 %v1207
    %v1233 = vpop.f32.mrf.mxu0
    %v1234 = vadd.f32 %v1170, %v1233
    %v1235 = vpop.f32.mrf.mxu0
    %v1236 = vadd.f32 %v1170, %v1235
    %1237 = vdwg.mxu0
    %v1238 = vld [vmem:[%s9] sm:$0xf]
    %v1239 = vpack.c.bf16 %v1221, %v1219
    %v1240 = vpack.c.bf16 %v1226, %v1224
    %v1241 = vpack.c.bf16 %v1231, %v1229
    %v1242 = vpack.c.bf16 %v1236, %v1234
    %v1243 = vld [vmem:[%s10] sm:$0xff]
    %1245 = vset.pattern.permute.xlu0 0
    %1246 = vperm.xlu0 %1245, %v1243
    %v1247 = vpop.permute.xlu0 %1246
    %v1250 = vsel %vm1139, %v1238, 0
    %v1253 = vsel %vm1139, %v1239, 0
    %v1256 = vsel %vm1139, %v1240, 0
    %v1259 = vsel %vm1139, %v1241, 0
    %v1262 = vsel %vm1139, %v1242, 0
    %1264 = vmatpush.bf16.xpose.msra.mxu0 0
    %1265 = vmatpush.bf16.xpose.msra.mxu0 0
    %1266 = vmatpush.bf16.xpose.msra.mxu0 0
    %1267 = vmatpush.bf16.xpose.msra.mxu0 0
    %1268 = vmatpush.bf16.xpose.msra.mxu0 %v1262
    %1269 = vmatpush.bf16.xpose.msra.mxu0 %v1259
    %1270 = vmatpush.bf16.xpose.msra.mxu0 %v1256
    %1271 = vmatpush.bf16.xpose.msra.mxu0 %v1253
    %1272 = vmatmul.bf16.gmra.mxu0 %v1250
    %v1273 = vpop.f32.mrf.mxu0
    %v1274 = vadd.f32 %v1247, %v1273
    %v1275 = vpop.f32.mrf.mxu0
    %1276 = vdwg.mxu0
    %1277 = vst.msk [vmem:[#allocation4] sm:$0xff] %vm1196, %v1274
    %v1286 = vrot.slane %v1219, 2
    %v1287 = vrot.slane %v1219, 4
    %v1288 = vrot.slane %v1219, 6
    %v1289 = vrot.slane %v1221, 2
    %v1290 = vrot.slane %v1221, 4
    %v1291 = vrot.slane %v1221, 6
    %v1292 = vrot.slane %v1224, 2
    %v1293 = vrot.slane %v1224, 4
    %v1294 = vrot.slane %v1224, 6
    %v1295 = vrot.slane %v1226, 2
    %v1296 = vrot.slane %v1226, 4
    %v1297 = vrot.slane %v1226, 6
    %v1298 = vrot.slane %v1229, 2
    %v1299 = vrot.slane %v1229, 4
    %v1300 = vrot.slane %v1229, 6
    %v1301 = vrot.slane %v1231, 2
    %v1302 = vrot.slane %v1231, 4
    %v1303 = vrot.slane %v1231, 6
    %v1304 = vrot.slane %v1234, 2
    %v1305 = vrot.slane %v1234, 4
    %v1306 = vrot.slane %v1234, 6
    %v1307 = vrot.slane %v1236, 2
    %v1308 = vrot.slane %v1236, 4
    %v1309 = vrot.slane %v1236, 6
    %v1310 = vperm.slane %v1219, 0
    %v1311 = vperm.slane %v1286, 0
    %v1312 = vperm.slane %v1287, 0
    %v1313 = vperm.slane %v1288, 0
    %v1314 = vperm.slane %v1224, 0
    %v1315 = vperm.slane %v1292, 0
    %v1316 = vperm.slane %v1293, 0
    %v1317 = vperm.slane %v1294, 0
    %v1318 = vperm.slane %v1229, 0
    %v1319 = vperm.slane %v1298, 0
    %v1320 = vperm.slane %v1299, 0
    %v1321 = vperm.slane %v1300, 0
    %v1322 = vperm.slane %v1234, 0
    %v1323 = vperm.slane %v1304, 0
    %v1324 = vperm.slane %v1305, 0
    %v1325 = vperm.slane %v1306, 0
    %v1326 = vsel %vm628, %v1311, %v1310
    %v1327 = vsel %vm630, %v1312, %v1326
    %v1328 = vsel %vm632, %v1313, %v1327
    %v1329 = vsel %vm634, %v1314, %v1328
    %v1330 = vsel %vm636, %v1315, %v1329
    %v1331 = vsel %vm638, %v1316, %v1330
    %v1332 = vsel %vm640, %v1317, %v1331
    %v1333 = vsel %vm628, %v1319, %v1318
    %v1334 = vsel %vm630, %v1320, %v1333
    %v1335 = vsel %vm632, %v1321, %v1334
    %v1336 = vsel %vm634, %v1322, %v1335
    %v1337 = vsel %vm636, %v1323, %v1336
    %v1338 = vsel %vm638, %v1324, %v1337
    %v1339 = vsel %vm640, %v1325, %v1338
    %v1342 = vperm.slane %v1219, 1
    %v1343 = vperm.slane %v1286, 1
    %v1344 = vperm.slane %v1287, 1
    %v1345 = vperm.slane %v1288, 1
    %v1346 = vperm.slane %v1224, 1
    %v1347 = vperm.slane %v1292, 1
    %v1348 = vperm.slane %v1293, 1
    %v1349 = vperm.slane %v1294, 1
    %v1350 = vperm.slane %v1229, 1
    %v1351 = vperm.slane %v1298, 1
    %v1352 = vperm.slane %v1299, 1
    %v1353 = vperm.slane %v1300, 1
    %v1354 = vperm.slane %v1234, 1
    %v1355 = vperm.slane %v1304, 1
    %v1356 = vperm.slane %v1305, 1
    %v1357 = vperm.slane %v1306, 1
    %v1358 = vsel %vm628, %v1343, %v1342
    %v1359 = vsel %vm630, %v1344, %v1358
    %v1360 = vsel %vm632, %v1345, %v1359
    %v1361 = vsel %vm634, %v1346, %v1360
    %v1362 = vsel %vm636, %v1347, %v1361
    %v1363 = vsel %vm638, %v1348, %v1362
    %v1364 = vsel %vm640, %v1349, %v1363
    %v1365 = vsel %vm628, %v1351, %v1350
    %v1366 = vsel %vm630, %v1352, %v1365
    %v1367 = vsel %vm632, %v1353, %v1366
    %v1368 = vsel %vm634, %v1354, %v1367
    %v1369 = vsel %vm636, %v1355, %v1368
    %v1370 = vsel %vm638, %v1356, %v1369
    %v1371 = vsel %vm640, %v1357, %v1370
    %1372 = vrot.lane.b32.xlu0 %v1364, 32
    %v1373 = vpop.permute.xlu0 %1372
    %1374 = vrot.lane.b32.xlu0 %v1371, 32
    %v1375 = vpop.permute.xlu0 %1374
    %v1378 = vperm.slane %v1221, 0
    %v1379 = vperm.slane %v1289, 0
    %v1380 = vperm.slane %v1290, 0
    %v1381 = vperm.slane %v1291, 0
    %v1382 = vperm.slane %v1226, 0
    %v1383 = vperm.slane %v1295, 0
    %v1384 = vperm.slane %v1296, 0
    %v1385 = vperm.slane %v1297, 0
    %v1386 = vperm.slane %v1231, 0
    %v1387 = vperm.slane %v1301, 0
    %v1388 = vperm.slane %v1302, 0
    %v1389 = vperm.slane %v1303, 0
    %v1390 = vperm.slane %v1236, 0
    %v1391 = vperm.slane %v1307, 0
    %v1392 = vperm.slane %v1308, 0
    %v1393 = vperm.slane %v1309, 0
    %v1394 = vsel %vm628, %v1379, %v1378
    %v1395 = vsel %vm630, %v1380, %v1394
    %v1396 = vsel %vm632, %v1381, %v1395
    %v1397 = vsel %vm634, %v1382, %v1396
    %v1398 = vsel %vm636, %v1383, %v1397
    %v1399 = vsel %vm638, %v1384, %v1398
    %v1400 = vsel %vm640, %v1385, %v1399
    %v1401 = vsel %vm628, %v1387, %v1386
    %v1402 = vsel %vm630, %v1388, %v1401
    %v1403 = vsel %vm632, %v1389, %v1402
    %v1404 = vsel %vm634, %v1390, %v1403
    %v1405 = vsel %vm636, %v1391, %v1404
    %v1406 = vsel %vm638, %v1392, %v1405
    %v1407 = vsel %vm640, %v1393, %v1406
    %1408 = vrot.lane.b32.xlu0 %v1400, 64
    %v1409 = vpop.permute.xlu0 %1408
    %1410 = vrot.lane.b32.xlu0 %v1407, 64
    %v1411 = vpop.permute.xlu0 %1410
    %v1414 = vperm.slane %v1221, 1
    %v1415 = vperm.slane %v1289, 1
    %v1416 = vperm.slane %v1290, 1
    %v1417 = vperm.slane %v1291, 1
    %v1418 = vperm.slane %v1226, 1
    %v1419 = vperm.slane %v1295, 1
    %v1420 = vperm.slane %v1296, 1
    %v1421 = vperm.slane %v1297, 1
    %v1422 = vperm.slane %v1231, 1
    %v1423 = vperm.slane %v1301, 1
    %v1424 = vperm.slane %v1302, 1
    %v1425 = vperm.slane %v1303, 1
    %v1426 = vperm.slane %v1236, 1
    %v1427 = vperm.slane %v1307, 1
    %v1428 = vperm.slane %v1308, 1
    %v1429 = vperm.slane %v1309, 1
    %v1430 = vsel %vm628, %v1415, %v1414
    %v1431 = vsel %vm630, %v1416, %v1430
    %v1432 = vsel %vm632, %v1417, %v1431
    %v1433 = vsel %vm634, %v1418, %v1432
    %v1434 = vsel %vm636, %v1419, %v1433
    %v1435 = vsel %vm638, %v1420, %v1434
    %v1436 = vsel %vm640, %v1421, %v1435
    %v1437 = vsel %vm628, %v1423, %v1422
    %v1438 = vsel %vm630, %v1424, %v1437
    %v1439 = vsel %vm632, %v1425, %v1438
    %v1440 = vsel %vm634, %v1426, %v1439
    %v1441 = vsel %vm636, %v1427, %v1440
    %v1442 = vsel %vm638, %v1428, %v1441
    %v1443 = vsel %vm640, %v1429, %v1442
    %1444 = vrot.lane.b32.xlu0 %v1436, 96
    %v1445 = vpop.permute.xlu0 %1444
    %1446 = vrot.lane.b32.xlu0 %v1443, 96
    %v1447 = vpop.permute.xlu0 %1446
    %v1450 = vsel %vm1139, %v1332, %v1373
    %v1451 = vsel %vm1139, %v1339, %v1375
    %v1452 = vsel %vm1196, %v1450, %v1409
    %v1453 = vsel %vm1196, %v1451, %v1411
    %vm1454 = vcmask 785408
    %v1455 = vsel %vm1454, %v1452, %v1445
    %v1456 = vsel %vm1454, %v1453, %v1447
    %v1457 = vpack.c.bf16 %v1456, %v1455
    %v1458 = vld [vmem:[%s5] sm:$0xf]
    %v1459 = vld [vmem:[%s5 + $0x4] sm:$0xf]
    %v1460 = vld [vmem:[%s5 + $0x8] sm:$0xf]
    %v1461 = vld [vmem:[%s5 + $0xc] sm:$0xf]
    %v1462 = vld [vmem:[%s5 + $0x10] sm:$0xf]
    %v1463 = vld [vmem:[%s5 + $0x14] sm:$0xf]
    %v1464 = vld [vmem:[%s5 + $0x18] sm:$0xf]
    %v1465 = vld [vmem:[%s5 + $0x1c] sm:$0xf]
    %v1466 = vld [vmem:[%s5 + $0x20] sm:$0xf]
    %v1467 = vld [vmem:[%s5 + $0x24] sm:$0xf]
    %v1468 = vld [vmem:[%s5 + $0x28] sm:$0xf]
    %v1469 = vld [vmem:[%s5 + $0x2c] sm:$0xf]
    %v1470 = vld [vmem:[%s5 + $0x30] sm:$0xf]
    %v1471 = vld [vmem:[%s5 + $0x34] sm:$0xf]
    %v1472 = vld [vmem:[%s5 + $0x38] sm:$0xf]
    %v1473 = vld [vmem:[%s5 + $0x3c] sm:$0xf]
    %v1474 = vld [vmem:[%s6] sm:$0x1]
    %v1476 = vperm.slane %v1474, 0
    %v1494 = vunpack.c.l.b16 %v1458
    %v1495 = vunpack.c.l.b16 %v1459
    %v1496 = vunpack.c.l.b16 %v1460
    %v1497 = vunpack.c.l.b16 %v1461
    %v1498 = vunpack.c.l.b16 %v1462
    %v1499 = vunpack.c.l.b16 %v1463
    %v1500 = vunpack.c.l.b16 %v1464
    %v1501 = vunpack.c.l.b16 %v1465
    %v1502 = vunpack.c.l.b16 %v1466
    %v1503 = vunpack.c.l.b16 %v1467
    %v1504 = vunpack.c.l.b16 %v1468
    %v1505 = vunpack.c.l.b16 %v1469
    %v1506 = vunpack.c.l.b16 %v1470
    %v1507 = vunpack.c.l.b16 %v1471
    %v1508 = vunpack.c.l.b16 %v1472
    %v1509 = vunpack.c.l.b16 %v1473
    %v1510 = vpack.c.b16 %v1495, %v1494
    %v1511 = vpack.c.b16 %v1497, %v1496
    %v1512 = vpack.c.b16 %v1499, %v1498
    %v1513 = vpack.c.b16 %v1501, %v1500
    %v1514 = vpack.c.b16 %v1503, %v1502
    %v1515 = vpack.c.b16 %v1505, %v1504
    %v1516 = vpack.c.b16 %v1507, %v1506
    %v1517 = vpack.c.b16 %v1509, %v1508
    %1526 = vmatpush.bf16.msra.mxu0 %v1517
    %1527 = vmatpush.bf16.msra.mxu0 %v1516
    %1528 = vmatpush.bf16.msra.mxu0 %v1515
    %1529 = vmatpush.bf16.msra.mxu0 %v1514
    %1530 = vmatpush.bf16.msra.mxu0 %v1513
    %1531 = vmatpush.bf16.msra.mxu0 %v1512
    %1532 = vmatpush.bf16.msra.mxu0 %v1511
    %1533 = vmatpush.bf16.msra.mxu0 %v1510
    %1534 = vmatmul.bf16.gmra.mxu0 %v1457
    %v1535 = vpop.f32.mrf.mxu0
    %v1536 = vadd.f32 %v1476, %v1535
    %v1537 = vpop.f32.mrf.mxu0
    %v1538 = vadd.f32 %v1476, %v1537
    %1539 = vdwg.mxu0
    %v1540 = vld [vmem:[%s11] sm:$0xf]
    %v1541 = vld [vmem:[%s11 + $0x4] sm:$0xf]
    %v1542 = vld [vmem:[%s11 + $0x8] sm:$0xf]
    %v1543 = vld [vmem:[%s11 + $0xc] sm:$0xf]
    %v1544 = vpack.c.bf16 %v1538, %v1536
    %v1545 = vld [vmem:[%s12] sm:$0xff]
    %v1546 = vld [vmem:[%s12 + $0x8] sm:$0xff]
    %v1547 = vld [vmem:[%s12 + $0x10] sm:$0xff]
    %v1548 = vld [vmem:[%s12 + $0x18] sm:$0xff]
    %1550 = vset.pattern.permute.xlu0 0
    %1551 = vperm.xlu0 %1550, %v1545
    %v1552 = vpop.permute.xlu0 %1551
    %1555 = vset.pattern.permute.xlu0 0
    %1556 = vperm.xlu0 %1555, %v1546
    %v1557 = vpop.permute.xlu0 %1556
    %1560 = vset.pattern.permute.xlu0 0
    %1561 = vperm.xlu0 %1560, %v1547
    %v1562 = vpop.permute.xlu0 %1561
    %1565 = vset.pattern.permute.xlu0 0
    %1566 = vperm.xlu0 %1565, %v1548
    %v1567 = vpop.permute.xlu0 %1566
    %v1573 = vunpack.c.l.b16 %v1540
    %v1574 = vunpack.c.l.b16 %v1541
    %v1575 = vunpack.c.l.b16 %v1542
    %v1576 = vunpack.c.l.b16 %v1543
    %v1577 = vpack.c.b16 %v1574, %v1573
    %v1578 = vpack.c.b16 %v1576, %v1575
    %v1580 = vsel %vm1196, %v1577, 0
    %v1583 = vsel %vm1196, %v1578, 0
    %v1586 = vsel %vm1196, %v1544, 0
    %1588 = vmatpush.bf16.xpose.msra.mxu0 0
    %1589 = vmatpush.bf16.xpose.msra.mxu0 0
    %1590 = vmatpush.bf16.xpose.msra.mxu0 0
    %1591 = vmatpush.bf16.xpose.msra.mxu0 0
    %1592 = vmatpush.bf16.xpose.msra.mxu0 0
    %1593 = vmatpush.bf16.xpose.msra.mxu0 0
    %1594 = vmatpush.bf16.xpose.msra.mxu0 0
    %1595 = vmatpush.bf16.xpose.msra.mxu0 %v1586
    %1596 = vmatmul.bf16.gmra.mxu0 %v1580
    %v1597 = vpop.f32.mrf.mxu0
    %v1598 = vadd.f32 %v1552, %v1597
    %v1599 = vpop.f32.mrf.mxu0
    %v1600 = vadd.f32 %v1557, %v1599
    %1601 = vmatmul.bf16.gmra.mxu0 %v1583
    %v1602 = vpop.f32.mrf.mxu0
    %v1603 = vadd.f32 %v1562, %v1602
    %v1604 = vpop.f32.mrf.mxu0
    %v1605 = vadd.f32 %v1567, %v1604
    %1606 = vdwg.mxu0
    %1607 = vst.msk [vmem:[%s15] sm:$0xff] %vm351, %v1598
    %1608 = vst.msk [vmem:[%s15 + $0x8] sm:$0xff] %vm351, %v1600
    %1609 = vst.msk [vmem:[%s15 + $0x10] sm:$0xff] %vm351, %v1603
    %1610 = vst.msk [vmem:[%s15 + $0x18] sm:$0xff] %vm351, %v1605
    // Predicated region
    $region54: #{tpu_custom_call.1} parent=1 // pred_check
      _
    $region55: #{tpu_custom_call.1} parent=1 // pred_check_branch
      %1612 = sbr.rel (0) target = $region57
    $region56: #{tpu_custom_call.1} parent=1 // pred_region
      %1614 = vsyncadd [#allocation3], 0
      %s1616 = sshll.u32 [#allocation2], 4
      %s1617 = int_to_ptr.vmem [resolvable:$true] %s1616
      %s1618 = sshll.u32 %s13, 4
      %s1619 = int_to_ptr.hbm [resolvable:$true] %s1618
      %1621 = dma.vmem_to_hbm [thread:$0]  %s1617, 128, %s1619, [#allocation3]
    $region57: #{tpu_custom_call.1} parent=1 // pred_fallthru
      _
    // Predicated region
    $region58: #{tpu_custom_call.1} parent=1 // pred_check
      _
    $region59: #{tpu_custom_call.1} parent=1 // pred_check_branch
      %1623 = sbr.rel (0) target = $region61
    $region60: #{tpu_custom_call.1} parent=1 // pred_region
      %1625 = vsyncadd [#allocation5], 0
      %s1627 = sshll.u32 [#allocation4], 4
      %s1628 = int_to_ptr.vmem [resolvable:$true] %s1627
      %s1629 = sshll.u32 %s14, 4
      %s1630 = int_to_ptr.hbm [resolvable:$true] %s1629
      %1632 = dma.vmem_to_hbm [thread:$0]  %s1628, 128, %s1630, [#allocation5]
    $region61: #{tpu_custom_call.1} parent=1 // pred_fallthru
      _
    // Predicated region
    $region62: #{tpu_custom_call.1} parent=1 // pred_check
      _
    $region63: #{tpu_custom_call.1} parent=1 // pred_check_branch
      %1634 = sbr.rel (0) target = $region65
    $region64: #{tpu_custom_call.1} parent=1 // pred_region
      _
    $region65: #{tpu_custom_call.1} parent=1 // pred_fallthru
      _
    // Predicated region
    $region66: #{tpu_custom_call.1} parent=1 // pred_check
      _
    $region67: #{tpu_custom_call.1} parent=1 // pred_check_branch
      %1636 = sbr.rel (0) target = $region69
    $region68: #{tpu_custom_call.1} parent=1 // pred_region
      %1638 = dma.done [#allocation3], 128
    $region69: #{tpu_custom_call.1} parent=1 // pred_fallthru
      _
    // Predicated region
    $region70: #{tpu_custom_call.1} parent=1 // pred_check
      _
    $region71: #{tpu_custom_call.1} parent=1 // pred_check_branch
      %1640 = sbr.rel (0) target = $region73
    $region72: #{tpu_custom_call.1} parent=1 // pred_region
      %1642 = dma.done [#allocation5], 128
    $region73: #{tpu_custom_call.1} parent=1 // pred_fallthru
      _
    // Predicated region
    $region74: #{tpu_custom_call.1} parent=1 // pred_check
      _
    $region75: #{tpu_custom_call.1} parent=1 // pred_check_branch
      %1644 = sbr.rel (0) target = $region77
    $region76: #{tpu_custom_call.1} parent=1 // pred_region
      _
    $region77: #{tpu_custom_call.1} parent=1 // pred_fallthru
      _
    %1645 = vsyncpa [#allocation3], 1
    %1646 = vsyncpa [#allocation5], 1

</llo_original>
